<compile_context>
chip_gen: v7x
topology: tpu7x:2x2x1
jax: 0.10.0
libtpu: 0.0.40
codegen_flags: <defaults>
</compile_context>

<pallas_src>
import functools

import jax
import jax.numpy as jnp
from jax import lax
from jax.experimental import pallas as pl
from jax.experimental.pallas import tpu as pltpu


def _round_up(x: int, m: int) -> int:
    return (x + m - 1) // m * m


# ---------------------------------------------------------------------------
# Pass 1: segment-sum edge weights into node degrees (MXU one-hot scatter),
# finalize into per-node normalization factors.
# Grid: (node_tiles, edge_tiles); edge axis is the reduction ("arbitrary").
# ---------------------------------------------------------------------------
def _make_degree_kernel(n_tile, e_tile, need_src, need_dst, norm, eps):

    def kernel(*refs):
        i = 0
        src_ref = dst_ref = None
        if need_src:
            src_ref = refs[i]; i += 1          # (e_tile, 1) int32  (column layout)
        if need_dst:
            dst_ref = refs[i]; i += 1          # (e_tile, 1) int32
        w_ref = refs[i]; i += 1                # (1, e_tile) float32 (row layout)
        out_refs = refs[i:]                    # each (1, n_tile) float32

        ni = pl.program_id(0)
        ei = pl.program_id(1)
        last_e = pl.num_programs(1) - 1

        w_row = w_ref[...]
        # Node ids covered by this node tile, laid out along lanes.
        node_ids = (lax.broadcasted_iota(jnp.int32, (e_tile, n_tile), 1)
                    + ni * n_tile)

        def scatter(idx_ref, deg_ref):
            @pl.when(ei == 0)
            def _init():
                deg_ref[...] = jnp.zeros_like(deg_ref)

            # one-hot^T[e, n] = (idx[e] == node_base + n); exact 0/1 values.
            oh_t = (node_ids == idx_ref[...]).astype(jnp.float32)
            # Segment-sum on the MXU: (1,Et) @ (Et,Nt) -> (1,Nt), f32 accumulation.
            deg_ref[...] += jnp.dot(w_row, oh_t,
                                    preferred_element_type=jnp.float32)

        def finalize(deg_ref, mode):
            @pl.when(ei == last_e)
            def _fin():
                d = deg_ref[...] + eps
                if mode == "rsqrt":
                    # deg^-0.5; zero/negative-degree (incl. padded) nodes masked to 0
                    # so no inf/nan can enter the pass-2 MXU gather.
                    nrm = jnp.where(d > 0.0, lax.rsqrt(d), 0.0)
                else:  # 1/deg  ('right'/'row')
                    nrm = jnp.where(d != 0.0,
                                    pl.reciprocal(d, approx=True), 0.0)
                deg_ref[...] = nrm

        o = 0
        if need_src:
            scatter(src_ref, out_refs[o])
            finalize(out_refs[o], "rsqrt")     # src side is always deg^-0.5
            o += 1
        if need_dst:
            scatter(dst_ref, out_refs[o])
            finalize(out_refs[o], "rsqrt" if norm == "both" else "recip")

    return kernel


# ---------------------------------------------------------------------------
# Pass 2: gather the per-node factors back onto edges (MXU one-hot gather) and
# apply them to the edge weights.
# Grid: (edge_tiles, node_tiles); node axis is the reduction ("arbitrary").
# ---------------------------------------------------------------------------
def _make_apply_kernel(n_tile, e_tile, need_src, need_dst):

    def kernel(*refs):
        i = 0
        src_ref = dst_ref = None
        if need_src:
            src_ref = refs[i]; i += 1          # (1, e_tile) int32 (row layout)
        if need_dst:
            dst_ref = refs[i]; i += 1          # (1, e_tile) int32
        w_ref = refs[i]; i += 1                # (1, e_tile) float32
        nrm_src_ref = nrm_dst_ref = None
        if need_src:
            nrm_src_ref = refs[i]; i += 1      # (1, n_tile) float32
        if need_dst:
            nrm_dst_ref = refs[i]; i += 1      # (1, n_tile) float32
        out_ref = refs[i]; i += 1              # (1, e_tile) float32
        scratch = refs[i:]
        s = 0
        fsrc_ref = fdst_ref = None
        if need_src:
            fsrc_ref = scratch[s]; s += 1      # (1, e_tile) f32 accumulator
        if need_dst:
            fdst_ref = scratch[s]; s += 1

        ni = pl.program_id(1)
        last_n = pl.num_programs(1) - 1

        node_ids = (lax.broadcasted_iota(jnp.int32, (n_tile, e_tile), 0)
                    + ni * n_tile)

        def gather(idx_ref, nrm_ref, acc_ref):
            @pl.when(ni == 0)
            def _init():
                acc_ref[...] = jnp.zeros_like(acc_ref)

            # one-hot[n, e] = (idx[e] == node_base + n)
            oh = (node_ids == idx_ref[...]).astype(jnp.float32)
            # Gather node factors onto edges on the MXU: (1,Nt) @ (Nt,Et) -> (1,Et).
            acc_ref[...] += jnp.dot(nrm_ref[...], oh,
                                    preferred_element_type=jnp.float32)

        if need_src:
            gather(src_ref, nrm_src_ref, fsrc_ref)
        if need_dst:
            gather(dst_ref, nrm_dst_ref, fdst_ref)

        @pl.when(ni == last_n)
        def _store():
            res = w_ref[...]
            if need_src:
                res = res * fsrc_ref[...]
            if need_dst:
                res = res * fdst_ref[...]
            out_ref[...] = res

    return kernel


@functools.partial(
    jax.jit,
    static_argnames=("num_src", "num_dst", "norm", "eps", "edge_tile", "node_tile"))
def udf_edge_weight_norm(src, dst, edge_weight, *, num_src, num_dst,
                         norm="both", eps=0.0, edge_tile=1024, node_tile=256):
    """JAX/Pallas equivalent of udfEdgeWeightNorm.forward.

    src, dst: int [E] edge endpoints; edge_weight: float [E] scalar edge weights.
    Returns float32 [E] normalized edge weights.
    """
    E = edge_weight.shape[0]
    need_src = norm in ("both", "column", "left")
    need_dst = norm in ("both", "row", "right")
    if not (need_src or need_dst):
        return edge_weight.astype(jnp.float32)
    # NOTE: the module's DGLError check (non-positive weights with norm='both') cannot be
    # evaluated on traced values; it remains the caller's responsibility.

    # ---- padding / tile selection: multiples of 128 keep stores unmasked and the MXU
    #      operands lane-aligned; per-step one-hot = e_tile*n_tile*4 bytes (~1 MiB at
    #      defaults), well inside v5e/v6e and v7x (64 MiB) scoped VMEM budgets. ----
    e_tile = min(int(edge_tile), _round_up(max(E, 1), 128))
    e_pad = _round_up(max(E, 1), e_tile)
    n_needed = []
    if need_src:
        n_needed.append(num_src)
    if need_dst:
        n_needed.append(num_dst)
    n_max = max(max(n_needed), 1)
    n_tile = min(int(node_tile), _round_up(n_max, 128))
    n_pad = _round_up(n_max, n_tile)
    n_edge_tiles = e_pad // e_tile
    n_node_tiles = n_pad // n_tile

    # ---- pad and lay out the edge arrays. Padded edges get idx=0, w=0 (no-ops). ----
    pad = e_pad - E
    w_flat = jnp.pad(edge_weight.astype(jnp.float32), (0, pad))
    src_flat = jnp.pad(src.astype(jnp.int32), (0, pad))
    dst_flat = jnp.pad(dst.astype(jnp.int32), (0, pad))
    w_row = w_flat.reshape(1, e_pad)

    # ------------------------------------------------------------------ pass 1
    deg_kernel = _make_degree_kernel(n_tile, e_tile, need_src, need_dst, norm,
                                     float(eps))
    p1_args, p1_specs = [], []
    if need_src:
        p1_args.append(src_flat.reshape(e_pad, 1))
        p1_specs.append(pl.BlockSpec((e_tile, 1), lambda ni, ei: (ei, 0)))
    if need_dst:
        p1_args.append(dst_flat.reshape(e_pad, 1))
        p1_specs.append(pl.BlockSpec((e_tile, 1), lambda ni, ei: (ei, 0)))
    p1_args.append(w_row)
    p1_specs.append(pl.BlockSpec((1, e_tile), lambda ni, ei: (0, ei)))

    n_factors = int(need_src) + int(need_dst)
    p1_out_shape = tuple(jax.ShapeDtypeStruct((1, n_pad), jnp.float32)
                         for _ in range(n_factors))
    p1_out_specs = tuple(pl.BlockSpec((1, n_tile), lambda ni, ei: (0, ni))
                         for _ in range(n_factors))

    nrm = pl.pallas_call(
        deg_kernel,
        out_shape=p1_out_shape,
        grid=(n_node_tiles, n_edge_tiles),
        in_specs=p1_specs,
        out_specs=p1_out_specs,
        compiler_params=pltpu.CompilerParams(
            dimension_semantics=("parallel", "arbitrary")),
    )(*p1_args)
    nrm = list(nrm)

    # ------------------------------------------------------------------ pass 2
    apply_kernel = _make_apply_kernel(n_tile, e_tile, need_src, need_dst)
    p2_args, p2_specs = [], []
    if need_src:
        p2_args.append(src_flat.reshape(1, e_pad))
        p2_specs.append(pl.BlockSpec((1, e_tile), lambda ei, ni: (0, ei)))
    if need_dst:
        p2_args.append(dst_flat.reshape(1, e_pad))
        p2_specs.append(pl.BlockSpec((1, e_tile), lambda ei, ni: (0, ei)))
    p2_args.append(w_row)
    p2_specs.append(pl.BlockSpec((1, e_tile), lambda ei, ni: (0, ei)))
    for f in nrm:
        p2_args.append(f)
        p2_specs.append(pl.BlockSpec((1, n_tile), lambda ei, ni: (0, ni)))

    scratch = [pltpu.VMEM((1, e_tile), jnp.float32) for _ in range(n_factors)]

    out_row = pl.pallas_call(
        apply_kernel,
        out_shape=jax.ShapeDtypeStruct((1, e_pad), jnp.float32),
        grid=(n_edge_tiles, n_node_tiles),
        in_specs=p2_specs,
        out_specs=pl.BlockSpec((1, e_tile), lambda ei, ni: (0, ei)),
        scratch_shapes=scratch,
        compiler_params=pltpu.CompilerParams(
            dimension_semantics=("parallel", "arbitrary")),
    )(*p2_args)

    # TODO(synk): the output is stored as (1, e_tile) row blocks (unmasked, lane-wide but
    #             single-sublane); a (e_pad//128, 128) packed store would cut vst count 8x.
    return out_row.reshape(e_pad)[:E]


def _reference(src, dst, w, num_src, num_dst, norm="both", eps=0.0):
    """Pure-JAX reference mirroring the PyTorch/DGL forward."""
    w = w.astype(jnp.float32)
    src_factor = jnp.ones_like(w)
    dst_factor = jnp.ones_like(w)
    if norm in ("both", "column", "left"):
        deg = jnp.zeros((num_src,), jnp.float32).at[src].add(w) + eps
        src_factor = jnp.power(deg, -0.5)[src]
    if norm in ("both", "row", "right"):
        deg = jnp.zeros((num_dst,), jnp.float32).at[dst].add(w) + eps
        n = jnp.power(deg, -0.5) if norm == "both" else 1.0 / deg
        dst_factor = n[dst]
    return src_factor * dst_factor * w


if __name__ == "__main__":
    key = jax.random.PRNGKey(0)
    k1, k2, k3 = jax.random.split(key, 3)

    NUM_SRC = 96        # graph.number_of_src_nodes()
    NUM_DST = 160       # graph.number_of_dst_nodes()
    NUM_EDGES = 700     # scalar edge weights, shape [E] (not a multiple of 128)

    src = jax.random.randint(k1, (NUM_EDGES,), 0, NUM_SRC, dtype=jnp.int32)
    dst = jax.random.randint(k2, (NUM_EDGES,), 0, NUM_DST, dtype=jnp.int32)
    # norm='both' requires strictly positive edge weights (the module's own check).
    edge_weight = jax.random.uniform(k3, (NUM_EDGES,), jnp.float32,
                                     minval=0.1, maxval=1.0)

    # Small tiles so this test exercises multi-tile grids (3 edge tiles x 2 node tiles)
    # plus edge/node padding; production defaults are edge_tile=1024, node_tile=256.
    out = udf_edge_weight_norm(src, dst, edge_weight,
                               num_src=NUM_SRC, num_dst=NUM_DST,
                               norm="both", eps=0.0,
                               edge_tile=256, node_tile=128)
    out = jax.block_until_ready(out)
    ref = _reference(src, dst, edge_weight, NUM_SRC, NUM_DST, "both", 0.0)
    assert out.shape == (NUM_EDGES,)
    assert bool(jnp.allclose(out, ref, rtol=1e-5, atol=1e-6)), "norm='both' mismatch"

    # 'right' normalization (1/in-degree on the destination side only); the kernel uses
    # the approximate EUP reciprocal, so compare with a looser tolerance.
    out_r = udf_edge_weight_norm(src, dst, edge_weight,
                                 num_src=NUM_SRC, num_dst=NUM_DST,
                                 norm="right", eps=0.0,
                                 edge_tile=256, node_tile=128)
    out_r = jax.block_until_ready(out_r)
    ref_r = _reference(src, dst, edge_weight, NUM_SRC, NUM_DST, "right", 0.0)
    assert bool(jnp.allclose(out_r, ref_r, rtol=2e-2, atol=1e-4)), "norm='right' mismatch"

    print("KERNEL_OK")
</pallas_src>

<mosaic_0001>
module attributes {stable_mosaic.version = 11 : i64} {
  func.func @kernel(%arg0: i32, %arg1: i32, %arg2: memref<256x1xi32, #tpu.memory_space<vmem>>, %arg3: memref<256x1xi32, #tpu.memory_space<vmem>>, %arg4: memref<1x256xf32, #tpu.memory_space<vmem>>, %arg5: memref<1x128xf32, #tpu.memory_space<vmem>>, %arg6: memref<1x128xf32, #tpu.memory_space<vmem>>) attributes {dimension_semantics = [#tpu.dimension_semantics<parallel>, #tpu.dimension_semantics<arbitrary>], iteration_bounds = array<i64: 2, 3>, scalar_prefetch = 0 : i64, scratch_operands = 0 : i64, tpu.core_type = #tpu.core_type<tc>, window_params = [{transform_indices = @transform_0, window_bounds = array<i64: 256, 1>}, {transform_indices = @transform_1, window_bounds = array<i64: 256, 1>}, {transform_indices = @transform_2, window_bounds = array<i64: 1, 256>}, {transform_indices = @transform_3, window_bounds = array<i64: 1, 128>}, {transform_indices = @transform_4, window_bounds = array<i64: 1, 128>}]} {
    %c0 = arith.constant 0 : index
    %c0_0 = arith.constant 0 : index
    %0 = vector.load %arg4[%c0, %c0_0] : memref<1x256xf32, #tpu.memory_space<vmem>>, vector<1x256xf32>
    %1 = tpu.iota {dimensions = array<i32: 1>} : vector<256x128xi32>
    %c128_i32 = arith.constant 128 : i32
    %2 = arith.muli %arg0, %c128_i32 : i32
    %3 = vector.broadcast %2 : i32 to vector<256x128xi32>
    %4 = arith.addi %1, %3 : vector<256x128xi32>
    %c0_i32 = arith.constant 0 : i32
    %5 = arith.cmpi eq, %arg1, %c0_i32 : i32
    %6 = arith.extui %5 : i1 to i32
    %c0_i32_1 = arith.constant 0 : i32
    %7 = arith.cmpi ne, %6, %c0_i32_1 : i32
    scf.if %7 {
      %cst_20 = arith.constant 0.000000e+00 : f32
      %35 = vector.broadcast %cst_20 : f32 to vector<1x128xf32>
      %c0_21 = arith.constant 0 : index
      %c0_22 = arith.constant 0 : index
      %36 = vector.load %arg5[%c0_21, %c0_22] : memref<1x128xf32, #tpu.memory_space<vmem>>, vector<1x128xf32>
      tpu.vector_store %arg5[%c0_21, %c0_22], %35 {strides = array<i32>} : memref<1x128xf32, #tpu.memory_space<vmem>>, vector<1x128xf32>,
    } else {
    }
    %c0_2 = arith.constant 0 : index
    %c0_3 = arith.constant 0 : index
    %8 = vector.load %arg2[%c0_2, %c0_3] : memref<256x1xi32, #tpu.memory_space<vmem>>, vector<256x1xi32>
    %9 = vector.broadcast %8 : vector<256x1xi32> to vector<256x128xi32>
    %10 = arith.cmpi eq, %4, %9 : vector<256x128xi32>
    %11 = arith.extui %10 : vector<256x128xi1> to vector<256x128xi32>
    %12 = arith.sitofp %11 : vector<256x128xi32> to vector<256x128xf32>
    %c0_4 = arith.constant 0 : index
    %c0_5 = arith.constant 0 : index
    %13 = vector.load %arg5[%c0_4, %c0_5] : memref<1x128xf32, #tpu.memory_space<vmem>>, vector<1x128xf32>
    %cst = arith.constant dense<0.000000e+00> : vector<1x128xf32>
    %14 = tpu.matmul %0, %12, %cst {dimension_numbers = #tpu.dot_dimension_numbers<[1], [0], [0], [1], [0, 0, 1, 1], [], []>} : vector<1x256xf32>, vector<256x128xf32>, vector<1x128xf32> -> vector<1x128xf32>
    %15 = arith.addf %13, %14 : vector<1x128xf32>
    %c0_6 = arith.constant 0 : index
    %c0_7 = arith.constant 0 : index
    %16 = vector.load %arg5[%c0_6, %c0_7] : memref<1x128xf32, #tpu.memory_space<vmem>>, vector<1x128xf32>
    tpu.vector_store %arg5[%c0_6, %c0_7], %15 {strides = array<i32>} : memref<1x128xf32, #tpu.memory_space<vmem>>, vector<1x128xf32>,
    %c2_i32 = arith.constant 2 : i32
    %17 = arith.cmpi eq, %arg1, %c2_i32 : i32
    %18 = arith.extui %17 : i1 to i32
    %c0_i32_8 = arith.constant 0 : i32
    %19 = arith.cmpi ne, %18, %c0_i32_8 : i32
    scf.if %19 {
      %c0_20 = arith.constant 0 : index
      %c0_21 = arith.constant 0 : index
      %35 = vector.load %arg5[%c0_20, %c0_21] : memref<1x128xf32, #tpu.memory_space<vmem>>, vector<1x128xf32>
      %cst_22 = arith.constant 0.000000e+00 : f32
      %36 = vector.broadcast %cst_22 : f32 to vector<1x128xf32>
      %37 = arith.addf %35, %36 : vector<1x128xf32>
      %cst_23 = arith.constant 0.000000e+00 : f32
      %38 = vector.broadcast %cst_23 : f32 to vector<1x128xf32>
      %39 = arith.cmpf ogt, %37, %38 : vector<1x128xf32>
      %40 = math.rsqrt %37 : vector<1x128xf32>
      %cst_24 = arith.constant 0.000000e+00 : f32
      %41 = vector.broadcast %cst_24 : f32 to vector<1x128xf32>
      %42 = arith.select %39, %40, %41 : vector<1x128xi1>, vector<1x128xf32>
      %c0_25 = arith.constant 0 : index
      %c0_26 = arith.constant 0 : index
      %43 = vector.load %arg5[%c0_25, %c0_26] : memref<1x128xf32, #tpu.memory_space<vmem>>, vector<1x128xf32>
      tpu.vector_store %arg5[%c0_25, %c0_26], %42 {strides = array<i32>} : memref<1x128xf32, #tpu.memory_space<vmem>>, vector<1x128xf32>,
    } else {
    }
    %c0_i32_9 = arith.constant 0 : i32
    %20 = arith.cmpi eq, %arg1, %c0_i32_9 : i32
    %21 = arith.extui %20 : i1 to i32
    %c0_i32_10 = arith.constant 0 : i32
    %22 = arith.cmpi ne, %21, %c0_i32_10 : i32
    scf.if %22 {
      %cst_20 = arith.constant 0.000000e+00 : f32
      %35 = vector.broadcast %cst_20 : f32 to vector<1x128xf32>
      %c0_21 = arith.constant 0 : index
      %c0_22 = arith.constant 0 : index
      %36 = vector.load %arg6[%c0_21, %c0_22] : memref<1x128xf32, #tpu.memory_space<vmem>>, vector<1x128xf32>
      tpu.vector_store %arg6[%c0_21, %c0_22], %35 {strides = array<i32>} : memref<1x128xf32, #tpu.memory_space<vmem>>, vector<1x128xf32>,
    } else {
    }
    %c0_11 = arith.constant 0 : index
    %c0_12 = arith.constant 0 : index
    %23 = vector.load %arg3[%c0_11, %c0_12] : memref<256x1xi32, #tpu.memory_space<vmem>>, vector<256x1xi32>
    %24 = vector.broadcast %23 : vector<256x1xi32> to vector<256x128xi32>
    %25 = arith.cmpi eq, %4, %24 : vector<256x128xi32>
    %26 = arith.extui %25 : vector<256x128xi1> to vector<256x128xi32>
    %27 = arith.sitofp %26 : vector<256x128xi32> to vector<256x128xf32>
    %c0_13 = arith.constant 0 : index
    %c0_14 = arith.constant 0 : index
    %28 = vector.load %arg6[%c0_13, %c0_14] : memref<1x128xf32, #tpu.memory_space<vmem>>, vector<1x128xf32>
    %cst_15 = arith.constant dense<0.000000e+00> : vector<1x128xf32>
    %29 = tpu.matmul %0, %27, %cst_15 {dimension_numbers = #tpu.dot_dimension_numbers<[1], [0], [0], [1], [0, 0, 1, 1], [], []>} : vector<1x256xf32>, vector<256x128xf32>, vector<1x128xf32> -> vector<1x128xf32>
    %30 = arith.addf %28, %29 : vector<1x128xf32>
    %c0_16 = arith.constant 0 : index
    %c0_17 = arith.constant 0 : index
    %31 = vector.load %arg6[%c0_16, %c0_17] : memref<1x128xf32, #tpu.memory_space<vmem>>, vector<1x128xf32>
    tpu.vector_store %arg6[%c0_16, %c0_17], %30 {strides = array<i32>} : memref<1x128xf32, #tpu.memory_space<vmem>>, vector<1x128xf32>,
    %c2_i32_18 = arith.constant 2 : i32
    %32 = arith.cmpi eq, %arg1, %c2_i32_18 : i32
    %33 = arith.extui %32 : i1 to i32
    %c0_i32_19 = arith.constant 0 : i32
    %34 = arith.cmpi ne, %33, %c0_i32_19 : i32
    scf.if %34 {
      %c0_20 = arith.constant 0 : index
      %c0_21 = arith.constant 0 : index
      %35 = vector.load %arg6[%c0_20, %c0_21] : memref<1x128xf32, #tpu.memory_space<vmem>>, vector<1x128xf32>
      %cst_22 = arith.constant 0.000000e+00 : f32
      %36 = vector.broadcast %cst_22 : f32 to vector<1x128xf32>
      %37 = arith.addf %35, %36 : vector<1x128xf32>
      %cst_23 = arith.constant 0.000000e+00 : f32
      %38 = vector.broadcast %cst_23 : f32 to vector<1x128xf32>
      %39 = arith.cmpf ogt, %37, %38 : vector<1x128xf32>
      %40 = math.rsqrt %37 : vector<1x128xf32>
      %cst_24 = arith.constant 0.000000e+00 : f32
      %41 = vector.broadcast %cst_24 : f32 to vector<1x128xf32>
      %42 = arith.select %39, %40, %41 : vector<1x128xi1>, vector<1x128xf32>
      %c0_25 = arith.constant 0 : index
      %c0_26 = arith.constant 0 : index
      %43 = vector.load %arg6[%c0_25, %c0_26] : memref<1x128xf32, #tpu.memory_space<vmem>>, vector<1x128xf32>
      tpu.vector_store %arg6[%c0_25, %c0_26], %42 {strides = array<i32>} : memref<1x128xf32, #tpu.memory_space<vmem>>, vector<1x128xf32>,
    } else {
    }
    return
  }
  func.func @transform_0(%arg0: i32, %arg1: i32) -> (i32, i32) {
    %c0_i32 = arith.constant 0 : i32
    %c0_i32_0 = arith.constant 0 : i32
    return %arg1, %c0_i32 : i32, i32
  }
  func.func @transform_1(%arg0: i32, %arg1: i32) -> (i32, i32) {
    %c0_i32 = arith.constant 0 : i32
    %c0_i32_0 = arith.constant 0 : i32
    return %arg1, %c0_i32 : i32, i32
  }
  func.func @transform_2(%arg0: i32, %arg1: i32) -> (i32, i32) {
    %c0_i32 = arith.constant 0 : i32
    %c0_i32_0 = arith.constant 0 : i32
    return %c0_i32, %arg1 : i32, i32
  }
  func.func @transform_3(%arg0: i32, %arg1: i32) -> (i32, i32) {
    %c0_i32 = arith.constant 0 : i32
    %c0_i32_0 = arith.constant 0 : i32
    return %c0_i32, %arg0 : i32, i32
  }
  func.func @transform_4(%arg0: i32, %arg1: i32) -> (i32, i32) {
    %c0_i32 = arith.constant 0 : i32
    %c0_i32_0 = arith.constant 0 : i32
    return %c0_i32, %arg0 : i32, i32
  }
}

module attributes {stable_mosaic.version = 11 : i64} {
  func.func @kernel(%arg0: i32, %arg1: i32, %arg2: memref<1x256xi32, #tpu.memory_space<vmem>>, %arg3: memref<1x256xi32, #tpu.memory_space<vmem>>, %arg4: memref<1x256xf32, #tpu.memory_space<vmem>>, %arg5: memref<1x128xf32, #tpu.memory_space<vmem>>, %arg6: memref<1x128xf32, #tpu.memory_space<vmem>>, %arg7: memref<1x256xf32, #tpu.memory_space<vmem>>, %arg8: memref<1x256xf32, #tpu.memory_space<vmem>>, %arg9: memref<1x256xf32, #tpu.memory_space<vmem>>) attributes {dimension_semantics = [#tpu.dimension_semantics<parallel>, #tpu.dimension_semantics<arbitrary>], iteration_bounds = array<i64: 3, 2>, scalar_prefetch = 0 : i64, scratch_operands = 2 : i64, tpu.core_type = #tpu.core_type<tc>, window_params = [{transform_indices = @transform_0, window_bounds = array<i64: 1, 256>}, {transform_indices = @transform_1, window_bounds = array<i64: 1, 256>}, {transform_indices = @transform_2, window_bounds = array<i64: 1, 256>}, {transform_indices = @transform_3, window_bounds = array<i64: 1, 128>}, {transform_indices = @transform_4, window_bounds = array<i64: 1, 128>}, {transform_indices = @transform_5, window_bounds = array<i64: 1, 256>}]} {
    %0 = tpu.iota {dimensions = array<i32: 0>} : vector<128x256xi32>
    %c128_i32 = arith.constant 128 : i32
    %1 = arith.muli %arg1, %c128_i32 : i32
    %2 = vector.broadcast %1 : i32 to vector<128x256xi32>
    %3 = arith.addi %0, %2 : vector<128x256xi32>
    %c0_i32 = arith.constant 0 : i32
    %4 = arith.cmpi eq, %arg1, %c0_i32 : i32
    %5 = arith.extui %4 : i1 to i32
    %c0_i32_0 = arith.constant 0 : i32
    %6 = arith.cmpi ne, %5, %c0_i32_0 : i32
    scf.if %6 {
      %cst_20 = arith.constant 0.000000e+00 : f32
      %33 = vector.broadcast %cst_20 : f32 to vector<1x256xf32>
      %c0_21 = arith.constant 0 : index
      %c0_22 = arith.constant 0 : index
      %34 = vector.load %arg8[%c0_21, %c0_22] : memref<1x256xf32, #tpu.memory_space<vmem>>, vector<1x256xf32>
      tpu.vector_store %arg8[%c0_21, %c0_22], %33 {strides = array<i32>} : memref<1x256xf32, #tpu.memory_space<vmem>>, vector<1x256xf32>,
    } else {
    }
    %c0 = arith.constant 0 : index
    %c0_1 = arith.constant 0 : index
    %7 = vector.load %arg2[%c0, %c0_1] : memref<1x256xi32, #tpu.memory_space<vmem>>, vector<1x256xi32>
    %8 = vector.broadcast %7 : vector<1x256xi32> to vector<128x256xi32>
    %9 = arith.cmpi eq, %3, %8 : vector<128x256xi32>
    %10 = arith.extui %9 : vector<128x256xi1> to vector<128x256xi32>
    %11 = arith.sitofp %10 : vector<128x256xi32> to vector<128x256xf32>
    %c0_2 = arith.constant 0 : index
    %c0_3 = arith.constant 0 : index
    %12 = vector.load %arg8[%c0_2, %c0_3] : memref<1x256xf32, #tpu.memory_space<vmem>>, vector<1x256xf32>
    %c0_4 = arith.constant 0 : index
    %c0_5 = arith.constant 0 : index
    %13 = vector.load %arg5[%c0_4, %c0_5] : memref<1x128xf32, #tpu.memory_space<vmem>>, vector<1x128xf32>
    %cst = arith.constant dense<0.000000e+00> : vector<1x256xf32>
    %14 = tpu.matmul %13, %11, %cst {dimension_numbers = #tpu.dot_dimension_numbers<[1], [0], [0], [1], [0, 0, 1, 1], [], []>} : vector<1x128xf32>, vector<128x256xf32>, vector<1x256xf32> -> vector<1x256xf32>
    %15 = arith.addf %12, %14 : vector<1x256xf32>
    %c0_6 = arith.constant 0 : index
    %c0_7 = arith.constant 0 : index
    %16 = vector.load %arg8[%c0_6, %c0_7] : memref<1x256xf32, #tpu.memory_space<vmem>>, vector<1x256xf32>
    tpu.vector_store %arg8[%c0_6, %c0_7], %15 {strides = array<i32>} : memref<1x256xf32, #tpu.memory_space<vmem>>, vector<1x256xf32>,
    %c0_i32_8 = arith.constant 0 : i32
    %17 = arith.cmpi eq, %arg1, %c0_i32_8 : i32
    %18 = arith.extui %17 : i1 to i32
    %c0_i32_9 = arith.constant 0 : i32
    %19 = arith.cmpi ne, %18, %c0_i32_9 : i32
    scf.if %19 {
      %cst_20 = arith.constant 0.000000e+00 : f32
      %33 = vector.broadcast %cst_20 : f32 to vector<1x256xf32>
      %c0_21 = arith.constant 0 : index
      %c0_22 = arith.constant 0 : index
      %34 = vector.load %arg9[%c0_21, %c0_22] : memref<1x256xf32, #tpu.memory_space<vmem>>, vector<1x256xf32>
      tpu.vector_store %arg9[%c0_21, %c0_22], %33 {strides = array<i32>} : memref<1x256xf32, #tpu.memory_space<vmem>>, vector<1x256xf32>,
    } else {
    }
    %c0_10 = arith.constant 0 : index
    %c0_11 = arith.constant 0 : index
    %20 = vector.load %arg3[%c0_10, %c0_11] : memref<1x256xi32, #tpu.memory_space<vmem>>, vector<1x256xi32>
    %21 = vector.broadcast %20 : vector<1x256xi32> to vector<128x256xi32>
    %22 = arith.cmpi eq, %3, %21 : vector<128x256xi32>
    %23 = arith.extui %22 : vector<128x256xi1> to vector<128x256xi32>
    %24 = arith.sitofp %23 : vector<128x256xi32> to vector<128x256xf32>
    %c0_12 = arith.constant 0 : index
    %c0_13 = arith.constant 0 : index
    %25 = vector.load %arg9[%c0_12, %c0_13] : memref<1x256xf32, #tpu.memory_space<vmem>>, vector<1x256xf32>
    %c0_14 = arith.constant 0 : index
    %c0_15 = arith.constant 0 : index
    %26 = vector.load %arg6[%c0_14, %c0_15] : memref<1x128xf32, #tpu.memory_space<vmem>>, vector<1x128xf32>
    %cst_16 = arith.constant dense<0.000000e+00> : vector<1x256xf32>
    %27 = tpu.matmul %26, %24, %cst_16 {dimension_numbers = #tpu.dot_dimension_numbers<[1], [0], [0], [1], [0, 0, 1, 1], [], []>} : vector<1x128xf32>, vector<128x256xf32>, vector<1x256xf32> -> vector<1x256xf32>
    %28 = arith.addf %25, %27 : vector<1x256xf32>
    %c0_17 = arith.constant 0 : index
    %c0_18 = arith.constant 0 : index
    %29 = vector.load %arg9[%c0_17, %c0_18] : memref<1x256xf32, #tpu.memory_space<vmem>>, vector<1x256xf32>
    tpu.vector_store %arg9[%c0_17, %c0_18], %28 {strides = array<i32>} : memref<1x256xf32, #tpu.memory_space<vmem>>, vector<1x256xf32>,
    %c1_i32 = arith.constant 1 : i32
    %30 = arith.cmpi eq, %arg1, %c1_i32 : i32
    %31 = arith.extui %30 : i1 to i32
    %c0_i32_19 = arith.constant 0 : i32
    %32 = arith.cmpi ne, %31, %c0_i32_19 : i32
    scf.if %32 {
      %c0_20 = arith.constant 0 : index
      %c0_21 = arith.constant 0 : index
      %33 = vector.load %arg4[%c0_20, %c0_21] : memref<1x256xf32, #tpu.memory_space<vmem>>, vector<1x256xf32>
      %c0_22 = arith.constant 0 : index
      %c0_23 = arith.constant 0 : index
      %34 = vector.load %arg8[%c0_22, %c0_23] : memref<1x256xf32, #tpu.memory_space<vmem>>, vector<1x256xf32>
      %35 = arith.mulf %33, %34 : vector<1x256xf32>
      %c0_24 = arith.constant 0 : index
      %c0_25 = arith.constant 0 : index
      %36 = vector.load %arg9[%c0_24, %c0_25] : memref<1x256xf32, #tpu.memory_space<vmem>>, vector<1x256xf32>
      %37 = arith.mulf %35, %36 : vector<1x256xf32>
      %c0_26 = arith.constant 0 : index
      %c0_27 = arith.constant 0 : index
      %38 = vector.load %arg7[%c0_26, %c0_27] : memref<1x256xf32, #tpu.memory_space<vmem>>, vector<1x256xf32>
      tpu.vector_store %arg7[%c0_26, %c0_27], %37 {strides = array<i32>} : memref<1x256xf32, #tpu.memory_space<vmem>>, vector<1x256xf32>,
    } else {
    }
    return
  }
  func.func @transform_0(%arg0: i32, %arg1: i32) -> (i32, i32) {
    %c0_i32 = arith.constant 0 : i32
    %c0_i32_0 = arith.constant 0 : i32
    return %c0_i32, %arg0 : i32, i32
  }
  func.func @transform_1(%arg0: i32, %arg1: i32) -> (i32, i32) {
    %c0_i32 = arith.constant 0 : i32
    %c0_i32_0 = arith.constant 0 : i32
    return %c0_i32, %arg0 : i32, i32
  }
  func.func @transform_2(%arg0: i32, %arg1: i32) -> (i32, i32) {
    %c0_i32 = arith.constant 0 : i32
    %c0_i32_0 = arith.constant 0 : i32
    return %c0_i32, %arg0 : i32, i32
  }
  func.func @transform_3(%arg0: i32, %arg1: i32) -> (i32, i32) {
    %c0_i32 = arith.constant 0 : i32
    %c0_i32_0 = arith.constant 0 : i32
    return %c0_i32, %arg1 : i32, i32
  }
  func.func @transform_4(%arg0: i32, %arg1: i32) -> (i32, i32) {
    %c0_i32 = arith.constant 0 : i32
    %c0_i32_0 = arith.constant 0 : i32
    return %c0_i32, %arg1 : i32, i32
  }
  func.func @transform_5(%arg0: i32, %arg1: i32) -> (i32, i32) {
    %c0_i32 = arith.constant 0 : i32
    %c0_i32_0 = arith.constant 0 : i32
    return %c0_i32, %arg0 : i32, i32
  }
}

</mosaic_0001>

<llo_original>
// kernel: udf_edge_weight_norm.3
$region0: #{udf_edge_weight_norm.3}
  #allocation0 [shape = 'u32[]', space=smem, size = 0x4, offset = 0x4, fixed_abs, tag = 'smem constant byte address 0x4 - core index']
  #allocation1 [shape = 'u32[144,128]{1,0:T(1,128)}', space=vmem, size = 0x12000, scoped, tag = 'internal scratch']
  #allocation2 [shape = 'f32[1,256]{1,0:T(1,128)}', space=vmem, size = 0x400, scoped, tag = 'scratch operand']
  #allocation3 [shape = 'f32[1,256]{1,0:T(1,128)}', space=vmem, size = 0x400, scoped, tag = 'scratch operand']
  %s0 = inlined_call_operand.vmem [shape: s32[1,768], index: 0, kind: input, shape index: {}]
  %s1 = inlined_call_operand.vmem [shape: s32[1,768], index: 1, kind: input, shape index: {}]
  %s2 = inlined_call_operand.vmem [shape: f32[1,768], index: 2, kind: input, shape index: {}]
  %s3 = inlined_call_operand.vmem [shape: f32[1,256], index: 3, kind: input, shape index: {}]
  %s4 = inlined_call_operand.vmem [shape: f32[1,256], index: 4, kind: input, shape index: {}]
  %s5 = inlined_call_operand.vmem [shape: f32[1,768], index: 5, kind: output, shape index: {}]
  %s6 = sld [smem:[#allocation0]]
  $region65: #{udf_edge_weight_norm.3} parent=0
    _
  %s8 = ssub.s32 1, %s6
  %s9 = scalar_select 0, %s8, %s6
  loop: start=0, step=1, limit=8
  $region2: #{udf_edge_weight_norm.3} parent=0 // loop_pre_header
    _
  $region3: #{udf_edge_weight_norm.3} parent=0 // loop_header
    %s11 = sphi 0, %s15
    %p12 = scmp.ge.s32.totalorder %s11, 8
    %s18 = sphi 0, %s30
    %s19 = sphi 0, %s26
    %s20 = sphi 0, %s18
    %s21 = sphi 0, %s19
    %s22 = sphi 0, %s20
    %s23 = sphi 0, %s21
    %s33 = sphi 0, %s35
    %s36 = sphi 0, %s33
    %s37 = sphi 0, %s36
    %s53 = sphi 0, %s37
    %s59 = sphi 0, %s61
    %s62 = sphi 0, %s59
    %s63 = sphi 0, %s62
    %s79 = sphi 0, %s63
    %s85 = sphi 0, %s87
    %s88 = sphi 0, %s85
    %s89 = sphi 0, %s88
    %s105 = sphi 0, %s89
    %s111 = sphi 0, %s113
    %s114 = sphi 0, %s111
    %s115 = sphi 0, %s114
    %s131 = sphi 0, %s115
    %s137 = sphi 0, %s139
    %s140 = sphi 0, %s137
    %s141 = sphi 0, %s140
    %s157 = sphi 0, %s141
    %s163 = sphi 0, %s165
    %s166 = sphi 0, %s163
    %s167 = sphi 0, %s166
    %s183 = sphi 0, %s167
  $region4: #{udf_edge_weight_norm.3} parent=0 // loop_header_branch
    %14 = sbr.rel (%p12) target = $region8
  $region5: #{udf_edge_weight_norm.3} parent=0 // loop_body
    %s16 = ssub.s32 %s11, 1
    %s17 = ssub.s32 %s11, 2
    %s24 = sadd.s32 1, %s19
    %p25 = scmp.ge.s32.totalorder %s24, 2
    %s26 = scalar_select %p25, 0, %s24
    %s27 = sadd.s32 1, %s18
    %s28 = scalar_select %p25, %s27, %s18
    %p29 = scmp.ge.s32.totalorder %s28, 3
    %s30 = scalar_select %p29, 0, %s28
    %s31 = ssub.s32 %s18, %s30
    %p32 = scmp.eq.s32.totalorder %s31, 0
    %s34 = sadd.s32 %s33, 1
    %s35 = scalar_select %p32, %s33, %s34
    %p38 = pneg %p32
    %p39 = scmp.eq.s32.totalorder %s11, 5
    %p40 = por %p38, %p39
    %p41 = scmp.ne.s32.totalorder %s33, %s36
    %p42 = scmp.eq.s32.totalorder %s11, 0
    %p43 = por %p41, %p42
    %p44 = scmp.ne.s32.totalorder %s33, %s36
    %p45 = scmp.eq.s32.totalorder %s16, 5
    %p46 = por %p44, %p45
    %p47 = scmp.ne.s32.totalorder %s36, %s37
    %p48 = scmp.eq.s32.totalorder %s16, 0
    %p49 = por %p47, %p48
    %p50 = scmp.ne.s32.totalorder %s36, %s37
    %p51 = scmp.eq.s32.totalorder %s17, 5
    %p52 = por %p50, %p51
    %p54 = scmp.ne.s32.totalorder %s37, %s53
    %p55 = scmp.eq.s32.totalorder %s17, 0
    %p56 = por %p54, %p55
    %s57 = ssub.s32 %s18, %s30
    %p58 = scmp.eq.s32.totalorder %s57, 0
    %s60 = sadd.s32 %s59, 1
    %s61 = scalar_select %p58, %s59, %s60
    %p64 = pneg %p58
    %p65 = scmp.eq.s32.totalorder %s11, 5
    %p66 = por %p64, %p65
    %p67 = scmp.ne.s32.totalorder %s59, %s62
    %p68 = scmp.eq.s32.totalorder %s11, 0
    %p69 = por %p67, %p68
    %p70 = scmp.ne.s32.totalorder %s59, %s62
    %p71 = scmp.eq.s32.totalorder %s16, 5
    %p72 = por %p70, %p71
    %p73 = scmp.ne.s32.totalorder %s62, %s63
    %p74 = scmp.eq.s32.totalorder %s16, 0
    %p75 = por %p73, %p74
    %p76 = scmp.ne.s32.totalorder %s62, %s63
    %p77 = scmp.eq.s32.totalorder %s17, 5
    %p78 = por %p76, %p77
    %p80 = scmp.ne.s32.totalorder %s63, %s79
    %p81 = scmp.eq.s32.totalorder %s17, 0
    %p82 = por %p80, %p81
    %s83 = ssub.s32 %s18, %s30
    %p84 = scmp.eq.s32.totalorder %s83, 0
    %s86 = sadd.s32 %s85, 1
    %s87 = scalar_select %p84, %s85, %s86
    %p90 = pneg %p84
    %p91 = scmp.eq.s32.totalorder %s11, 5
    %p92 = por %p90, %p91
    %p93 = scmp.ne.s32.totalorder %s85, %s88
    %p94 = scmp.eq.s32.totalorder %s11, 0
    %p95 = por %p93, %p94
    %p96 = scmp.ne.s32.totalorder %s85, %s88
    %p97 = scmp.eq.s32.totalorder %s16, 5
    %p98 = por %p96, %p97
    %p99 = scmp.ne.s32.totalorder %s88, %s89
    %p100 = scmp.eq.s32.totalorder %s16, 0
    %p101 = por %p99, %p100
    %p102 = scmp.ne.s32.totalorder %s88, %s89
    %p103 = scmp.eq.s32.totalorder %s17, 5
    %p104 = por %p102, %p103
    %p106 = scmp.ne.s32.totalorder %s89, %s105
    %p107 = scmp.eq.s32.totalorder %s17, 0
    %p108 = por %p106, %p107
    %s109 = ssub.s32 %s19, %s26
    %p110 = scmp.eq.s32.totalorder %s109, 0
    %s112 = sadd.s32 %s111, 1
    %s113 = scalar_select %p110, %s111, %s112
    %p116 = pneg %p110
    %p117 = scmp.eq.s32.totalorder %s11, 5
    %p118 = por %p116, %p117
    %p119 = scmp.ne.s32.totalorder %s111, %s114
    %p120 = scmp.eq.s32.totalorder %s11, 0
    %p121 = por %p119, %p120
    %p122 = scmp.ne.s32.totalorder %s111, %s114
    %p123 = scmp.eq.s32.totalorder %s16, 5
    %p124 = por %p122, %p123
    %p125 = scmp.ne.s32.totalorder %s114, %s115
    %p126 = scmp.eq.s32.totalorder %s16, 0
    %p127 = por %p125, %p126
    %p128 = scmp.ne.s32.totalorder %s114, %s115
    %p129 = scmp.eq.s32.totalorder %s17, 5
    %p130 = por %p128, %p129
    %p132 = scmp.ne.s32.totalorder %s115, %s131
    %p133 = scmp.eq.s32.totalorder %s17, 0
    %p134 = por %p132, %p133
    %s135 = ssub.s32 %s19, %s26
    %p136 = scmp.eq.s32.totalorder %s135, 0
    %s138 = sadd.s32 %s137, 1
    %s139 = scalar_select %p136, %s137, %s138
    %p142 = pneg %p136
    %p143 = scmp.eq.s32.totalorder %s11, 5
    %p144 = por %p142, %p143
    %p145 = scmp.ne.s32.totalorder %s137, %s140
    %p146 = scmp.eq.s32.totalorder %s11, 0
    %p147 = por %p145, %p146
    %p148 = scmp.ne.s32.totalorder %s137, %s140
    %p149 = scmp.eq.s32.totalorder %s16, 5
    %p150 = por %p148, %p149
    %p151 = scmp.ne.s32.totalorder %s140, %s141
    %p152 = scmp.eq.s32.totalorder %s16, 0
    %p153 = por %p151, %p152
    %p154 = scmp.ne.s32.totalorder %s140, %s141
    %p155 = scmp.eq.s32.totalorder %s17, 5
    %p156 = por %p154, %p155
    %p158 = scmp.ne.s32.totalorder %s141, %s157
    %p159 = scmp.eq.s32.totalorder %s17, 0
    %p160 = por %p158, %p159
    %s161 = ssub.s32 %s18, %s30
    %p162 = scmp.eq.s32.totalorder %s161, 0
    %s164 = sadd.s32 %s163, 1
    %s165 = scalar_select %p162, %s163, %s164
    %p168 = pneg %p162
    %p169 = scmp.eq.s32.totalorder %s11, 5
    %p170 = por %p168, %p169
    %p171 = scmp.ne.s32.totalorder %s163, %s166
    %p172 = scmp.eq.s32.totalorder %s11, 0
    %p173 = por %p171, %p172
    %p174 = scmp.ne.s32.totalorder %s163, %s166
    %p175 = scmp.eq.s32.totalorder %s16, 5
    %p176 = por %p174, %p175
    %p177 = scmp.ne.s32.totalorder %s166, %s167
    %p178 = scmp.eq.s32.totalorder %s16, 0
    %p179 = por %p177, %p178
    %p180 = scmp.ne.s32.totalorder %s166, %s167
    %p181 = scmp.eq.s32.totalorder %s17, 5
    %p182 = por %p180, %p181
    %p184 = scmp.ne.s32.totalorder %s167, %s183
    %p185 = scmp.eq.s32.totalorder %s17, 0
    %p186 = por %p184, %p185
    %p187 = scmp.le.s32.totalorder 1, %s11
    %p188 = scmp.lt.s32.totalorder %s11, 7
    %p189 = pnand %p187, %p188
    %p190 = pneg %p189
    // Predicated region
    $region9: #{udf_edge_weight_norm.3} parent=5 // pred_check
      _
    $region10: #{udf_edge_weight_norm.3} parent=5 // pred_check_branch
      %192 = sbr.rel (%p189) target = $region12
    $region11: #{udf_edge_weight_norm.3} parent=5 // pred_region
      %s193 = ssub.s32 %s11, 1
    $region12: #{udf_edge_weight_norm.3} parent=5 // pred_fallthru
      _
    %p194 = scmp.lt.s32.totalorder %s11, 6
    // Predicated region
    $region13: #{udf_edge_weight_norm.3} parent=5 // pred_check
      %p195 = pneg %p194
    $region14: #{udf_edge_weight_norm.3} parent=5 // pred_check_branch
      %197 = sbr.rel (%p195) target = $region16
    $region15: #{udf_edge_weight_norm.3} parent=5 // pred_region
      // Predicated region
      $region17: #{udf_edge_weight_norm.3} parent=15 // pred_check
        %p198 = pneg %p43
      $region18: #{udf_edge_weight_norm.3} parent=15 // pred_check_branch
        %200 = sbr.rel (%p198) target = $region20
      $region19: #{udf_edge_weight_norm.3} parent=15 // pred_region
        %s201 = smul.u32 2, %s18
        %p202 = scmp.lt.s32.totalorder %s201, 5
        %s203 = scalar_select %p202, %s201, 5
        %s204 = scalar_lea.vmem %s0, %s203
        %s205 = smul.u32 2, %s18
      $region20: #{udf_edge_weight_norm.3} parent=15 // pred_fallthru
        _
      // Predicated region
      $region21: #{udf_edge_weight_norm.3} parent=15 // pred_check
        %p206 = pneg %p69
      $region22: #{udf_edge_weight_norm.3} parent=15 // pred_check_branch
        %208 = sbr.rel (%p206) target = $region24
      $region23: #{udf_edge_weight_norm.3} parent=15 // pred_region
        %s209 = smul.u32 2, %s18
        %p210 = scmp.lt.s32.totalorder %s209, 5
        %s211 = scalar_select %p210, %s209, 5
        %s212 = scalar_lea.vmem %s1, %s211
        %s213 = smul.u32 2, %s18
      $region24: #{udf_edge_weight_norm.3} parent=15 // pred_fallthru
        _
      // Predicated region
      $region25: #{udf_edge_weight_norm.3} parent=15 // pred_check
        %p214 = pneg %p95
      $region26: #{udf_edge_weight_norm.3} parent=15 // pred_check_branch
        %216 = sbr.rel (%p214) target = $region28
      $region27: #{udf_edge_weight_norm.3} parent=15 // pred_region
        %s217 = smul.u32 2, %s18
        %p218 = scmp.lt.s32.totalorder %s217, 5
        %s219 = scalar_select %p218, %s217, 5
        %s220 = scalar_lea.vmem %s2, %s219
        %s221 = smul.u32 2, %s18
      $region28: #{udf_edge_weight_norm.3} parent=15 // pred_fallthru
        _
      // Predicated region
      $region29: #{udf_edge_weight_norm.3} parent=15 // pred_check
        %p222 = pneg %p121
      $region30: #{udf_edge_weight_norm.3} parent=15 // pred_check_branch
        %224 = sbr.rel (%p222) target = $region32
      $region31: #{udf_edge_weight_norm.3} parent=15 // pred_region
        %p225 = scmp.lt.s32.totalorder %s19, 1
        %s226 = scalar_select %p225, %s19, 1
        %s227 = scalar_lea.vmem %s3, %s226
      $region32: #{udf_edge_weight_norm.3} parent=15 // pred_fallthru
        _
      // Predicated region
      $region33: #{udf_edge_weight_norm.3} parent=15 // pred_check
        %p228 = pneg %p147
      $region34: #{udf_edge_weight_norm.3} parent=15 // pred_check_branch
        %230 = sbr.rel (%p228) target = $region36
      $region35: #{udf_edge_weight_norm.3} parent=15 // pred_region
        %p231 = scmp.lt.s32.totalorder %s19, 1
        %s232 = scalar_select %p231, %s19, 1
        %s233 = scalar_lea.vmem %s4, %s232
      $region36: #{udf_edge_weight_norm.3} parent=15 // pred_fallthru
        _
    $region16: #{udf_edge_weight_norm.3} parent=5 // pred_fallthru
      _
    %p234 = scmp.le.s32.totalorder 1, %s11
    %p235 = scmp.lt.s32.totalorder %s11, 7
    %p236 = pnand %p234, %p235
    %p237 = pneg %p236
    // Predicated region
    $region37: #{udf_edge_weight_norm.3} parent=5 // pred_check
      _
    $region38: #{udf_edge_weight_norm.3} parent=5 // pred_check_branch
      %239 = sbr.rel (%p236) target = $region40
    $region39: #{udf_edge_weight_norm.3} parent=5 // pred_region
      %s240 = ssub.s32 %s11, 1
      %s241 = smul.u32 2, %s20
      %p242 = scmp.lt.s32.totalorder %s241, 5
      %s243 = scalar_select %p242, %s241, 5
      %s244 = scalar_lea.vmem %s0, %s243
      %p245 = pneg %p49
      %p246 = pneg %p46
      %s247 = smul.u32 2, %s20
      %p248 = scmp.lt.s32.totalorder %s247, 5
      %s249 = scalar_select %p248, %s247, 5
      %s250 = scalar_lea.vmem %s1, %s249
      %p251 = pneg %p75
      %p252 = pneg %p72
      %s253 = smul.u32 2, %s20
      %p254 = scmp.lt.s32.totalorder %s253, 5
      %s255 = scalar_select %p254, %s253, 5
      %s256 = scalar_lea.vmem %s2, %s255
      %p257 = pneg %p101
      %p258 = pneg %p98
      %p259 = scmp.lt.s32.totalorder %s21, 1
      %s260 = scalar_select %p259, %s21, 1
      %s261 = scalar_lea.vmem %s3, %s260
      %p262 = pneg %p127
      %p263 = pneg %p124
      %p264 = scmp.lt.s32.totalorder %s21, 1
      %s265 = scalar_select %p264, %s21, 1
      %s266 = scalar_lea.vmem %s4, %s265
      %p267 = pneg %p153
      %p268 = pneg %p150
      %p269 = pneg %p179
      %p270 = pneg %p176
      %s271 = smul.u32 2, %s20
      %p272 = scmp.lt.s32.totalorder %s271, 5
      %s273 = scalar_select %p272, %s271, 5
      %s274 = scalar_lea.vmem %s5, %s273
      %s275 = smul.u32 2, %s20
      %p276 = scmp.lt.s32.totalorder %s275, 5
      %s277 = scalar_select %p276, %s275, 5
      %s278 = scalar_lea.vmem %s0, %s277
      %s279 = smul.u32 2, %s20
      %s280 = smul.u32 2, %s20
      %p281 = scmp.lt.s32.totalorder %s280, 5
      %s282 = scalar_select %p281, %s280, 5
      %s283 = scalar_lea.vmem %s1, %s282
      %s284 = smul.u32 2, %s20
      %s285 = smul.u32 2, %s20
      %p286 = scmp.lt.s32.totalorder %s285, 5
      %s287 = scalar_select %p286, %s285, 5
      %s288 = scalar_lea.vmem %s2, %s287
      %s289 = smul.u32 2, %s20
      %p290 = scmp.lt.s32.totalorder %s21, 1
      %s291 = scalar_select %p290, %s21, 1
      %s292 = scalar_lea.vmem %s3, %s291
      %p293 = scmp.lt.s32.totalorder %s21, 1
      %s294 = scalar_select %p293, %s21, 1
      %s295 = scalar_lea.vmem %s4, %s294
      %s296 = smul.u32 2, %s20
      %p297 = scmp.lt.s32.totalorder %s296, 5
      %s298 = scalar_select %p297, %s296, 5
      %s299 = scalar_lea.vmem %s5, %s298
      %s300 = smul.u32 2, %s20
      %v301 = vlaneseq
      %v302 = vshrl.u32 %v301, 7
      %v303 = vadd.s32 %v302, 8
      %v304 = vadd.s32 %v302, 16
      %v305 = vadd.s32 %v302, 24
      %v306 = vadd.s32 %v302, 32
      %v307 = vadd.s32 %v302, 40
      %v308 = vadd.s32 %v302, 48
      %v309 = vadd.s32 %v302, 56
      %v310 = vadd.s32 %v302, 64
      %v311 = vadd.s32 %v302, 72
      %v312 = vadd.s32 %v302, 80
      %v313 = vadd.s32 %v302, 88
      %v314 = vadd.s32 %v302, 96
      %v315 = vadd.s32 %v302, 104
      %v316 = vadd.s32 %v302, 112
      %v317 = vadd.s32 %v302, 120
      %s318 = smul.u32 %s21, 128
      %v319 = vstv %s318
      %v320 = vadd.s32 %v302, %v319
      %v321 = vadd.s32 %v303, %v319
      %v322 = vadd.s32 %v304, %v319
      %v323 = vadd.s32 %v305, %v319
      %v324 = vadd.s32 %v306, %v319
      %v325 = vadd.s32 %v307, %v319
      %v326 = vadd.s32 %v308, %v319
      %v327 = vadd.s32 %v309, %v319
      %v328 = vadd.s32 %v310, %v319
      %v329 = vadd.s32 %v311, %v319
      %v330 = vadd.s32 %v312, %v319
      %v331 = vadd.s32 %v313, %v319
      %v332 = vadd.s32 %v314, %v319
      %v333 = vadd.s32 %v315, %v319
      %v334 = vadd.s32 %v316, %v319
      %v335 = vadd.s32 %v317, %v319
      %p336 = scmp.eq.s32.totalorder %s21, 0
      // Predicated region
      $region41: #{udf_edge_weight_norm.3} parent=39 // pred_check
        %p337 = pneg %p336
      $region42: #{udf_edge_weight_norm.3} parent=39 // pred_check_branch
        %339 = sbr.rel (%p337) target = $region44
      $region43: #{udf_edge_weight_norm.3} parent=39 // pred_region
        %v340 = vlaneseq
        %vm341 = vcmp.ge.s32.totalorder %v340, 0
        %vm342 = vcmp.lt.s32.totalorder %v340, 256
        %vm343 = vmand %vm341, %vm342
        %344 = vst.msk [vmem:[#allocation2] sm:$0x3] %vm343, 0.0
      $region44: #{udf_edge_weight_norm.3} parent=39 // pred_fallthru
        _
      %v345 = vld [vmem:[%s278] sm:$0x3]
      %v346 = vlaneseq
      %v347 = vshrl.u32 %v346, 7
      %v348 = vsub.s32 0, %v347
      %v349 = vrot.slane %v345, %v348
      %v350 = vlaneseq
      %v351 = vshrl.u32 %v350, 7
      %v352 = vsub.s32 1, %v351
      %v353 = vrot.slane %v345, %v352
      %vm354 = vcmp.eq.s32.totalorder %v320, %v349
      %vm355 = vcmp.eq.s32.totalorder %v320, %v353
      %vm356 = vcmp.eq.s32.totalorder %v321, %v349
      %vm357 = vcmp.eq.s32.totalorder %v321, %v353
      %vm358 = vcmp.eq.s32.totalorder %v322, %v349
      %vm359 = vcmp.eq.s32.totalorder %v322, %v353
      %vm360 = vcmp.eq.s32.totalorder %v323, %v349
      %vm361 = vcmp.eq.s32.totalorder %v323, %v353
      %vm362 = vcmp.eq.s32.totalorder %v324, %v349
      %vm363 = vcmp.eq.s32.totalorder %v324, %v353
      %vm364 = vcmp.eq.s32.totalorder %v325, %v349
      %vm365 = vcmp.eq.s32.totalorder %v325, %v353
      %vm366 = vcmp.eq.s32.totalorder %v326, %v349
      %vm367 = vcmp.eq.s32.totalorder %v326, %v353
      %vm368 = vcmp.eq.s32.totalorder %v327, %v349
      %vm369 = vcmp.eq.s32.totalorder %v327, %v353
      %vm370 = vcmp.eq.s32.totalorder %v328, %v349
      %vm371 = vcmp.eq.s32.totalorder %v328, %v353
      %vm372 = vcmp.eq.s32.totalorder %v329, %v349
      %vm373 = vcmp.eq.s32.totalorder %v329, %v353
      %vm374 = vcmp.eq.s32.totalorder %v330, %v349
      %vm375 = vcmp.eq.s32.totalorder %v330, %v353
      %vm376 = vcmp.eq.s32.totalorder %v331, %v349
      %vm377 = vcmp.eq.s32.totalorder %v331, %v353
      %vm378 = vcmp.eq.s32.totalorder %v332, %v349
      %vm379 = vcmp.eq.s32.totalorder %v332, %v353
      %vm380 = vcmp.eq.s32.totalorder %v333, %v349
      %vm381 = vcmp.eq.s32.totalorder %v333, %v353
      %vm382 = vcmp.eq.s32.totalorder %v334, %v349
      %vm383 = vcmp.eq.s32.totalorder %v334, %v353
      %vm384 = vcmp.eq.s32.totalorder %v335, %v349
      %vm385 = vcmp.eq.s32.totalorder %v335, %v353
      %v386 = vsel %vm354, 1, 0
      %v387 = vsel %vm355, 1, 0
      %v388 = vsel %vm356, 1, 0
      %v389 = vsel %vm357, 1, 0
      %v390 = vsel %vm358, 1, 0
      %v391 = vsel %vm359, 1, 0
      %v392 = vsel %vm360, 1, 0
      %v393 = vsel %vm361, 1, 0
      %v394 = vsel %vm362, 1, 0
      %v395 = vsel %vm363, 1, 0
      %v396 = vsel %vm364, 1, 0
      %v397 = vsel %vm365, 1, 0
      %v398 = vsel %vm366, 1, 0
      %v399 = vsel %vm367, 1, 0
      %v400 = vsel %vm368, 1, 0
      %v401 = vsel %vm369, 1, 0
      %v402 = vsel %vm370, 1, 0
      %v403 = vsel %vm371, 1, 0
      %v404 = vsel %vm372, 1, 0
      %v405 = vsel %vm373, 1, 0
      %v406 = vsel %vm374, 1, 0
      %v407 = vsel %vm375, 1, 0
      %v408 = vsel %vm376, 1, 0
      %v409 = vsel %vm377, 1, 0
      %v410 = vsel %vm378, 1, 0
      %v411 = vsel %vm379, 1, 0
      %v412 = vsel %vm380, 1, 0
      %v413 = vsel %vm381, 1, 0
      %v414 = vsel %vm382, 1, 0
      %v415 = vsel %vm383, 1, 0
      %v416 = vsel %vm384, 1, 0
      %v417 = vsel %vm385, 1, 0
      %v418 = vcvt.s32.f32 %v386
      %v419 = vcvt.s32.f32 %v387
      %v420 = vcvt.s32.f32 %v388
      %v421 = vcvt.s32.f32 %v389
      %v422 = vcvt.s32.f32 %v390
      %v423 = vcvt.s32.f32 %v391
      %v424 = vcvt.s32.f32 %v392
      %v425 = vcvt.s32.f32 %v393
      %v426 = vcvt.s32.f32 %v394
      %v427 = vcvt.s32.f32 %v395
      %v428 = vcvt.s32.f32 %v396
      %v429 = vcvt.s32.f32 %v397
      %v430 = vcvt.s32.f32 %v398
      %v431 = vcvt.s32.f32 %v399
      %v432 = vcvt.s32.f32 %v400
      %v433 = vcvt.s32.f32 %v401
      %v434 = vcvt.s32.f32 %v402
      %v435 = vcvt.s32.f32 %v403
      %v436 = vcvt.s32.f32 %v404
      %v437 = vcvt.s32.f32 %v405
      %v438 = vcvt.s32.f32 %v406
      %v439 = vcvt.s32.f32 %v407
      %v440 = vcvt.s32.f32 %v408
      %v441 = vcvt.s32.f32 %v409
      %v442 = vcvt.s32.f32 %v410
      %v443 = vcvt.s32.f32 %v411
      %v444 = vcvt.s32.f32 %v412
      %v445 = vcvt.s32.f32 %v413
      %v446 = vcvt.s32.f32 %v414
      %v447 = vcvt.s32.f32 %v415
      %v448 = vcvt.s32.f32 %v416
      %v449 = vcvt.s32.f32 %v417
      %v450 = vld [vmem:[#allocation2] sm:$0x3]
      %v451 = vld [vmem:[%s292] sm:$0x1]
      %452 = vmatprep.subr.mxu0 %v419
      %453 = vmatpush1.msra.mxu0 %v418
      %454 = vmatprep.subr.mxu0 %v421
      %455 = vmatpush1.msra.mxu0 %v420
      %456 = vmatprep.subr.mxu0 %v423
      %457 = vmatpush1.msra.mxu0 %v422
      %458 = vmatprep.subr.mxu0 %v425
      %459 = vmatpush1.msra.mxu0 %v424
      %460 = vmatprep.subr.mxu0 %v427
      %461 = vmatpush1.msra.mxu0 %v426
      %462 = vmatprep.subr.mxu0 %v429
      %463 = vmatpush1.msra.mxu0 %v428
      %464 = vmatprep.subr.mxu0 %v431
      %465 = vmatpush1.msra.mxu0 %v430
      %466 = vmatprep.subr.mxu0 %v433
      %467 = vmatpush1.msra.mxu0 %v432
      %468 = vmatprep.subr.mxu0 %v435
      %469 = vmatpush1.msra.mxu0 %v434
      %470 = vmatprep.subr.mxu0 %v437
      %471 = vmatpush1.msra.mxu0 %v436
      %472 = vmatprep.subr.mxu0 %v439
      %473 = vmatpush1.msra.mxu0 %v438
      %474 = vmatprep.subr.mxu0 %v441
      %475 = vmatpush1.msra.mxu0 %v440
      %476 = vmatprep.subr.mxu0 %v443
      %477 = vmatpush1.msra.mxu0 %v442
      %478 = vmatprep.subr.mxu0 %v445
      %479 = vmatpush1.msra.mxu0 %v444
      %480 = vmatprep.subr.mxu0 %v447
      %481 = vmatpush1.msra.mxu0 %v446
      %482 = vmatprep.subr.mxu0 %v449
      %483 = vmatpush1.msra.mxu0 %v448
      %484 = vmatprep.subr.mxu0 0.0
      %485 = vmatpush1.msra.mxu0 0.0
      %486 = vmatprep.subr.mxu0 0.0
      %487 = vmatpush1.msra.mxu0 0.0
      %488 = vmatprep.subr.mxu0 0.0
      %489 = vmatpush1.msra.mxu0 0.0
      %490 = vmatprep.subr.mxu0 0.0
      %491 = vmatpush1.msra.mxu0 0.0
      %492 = vmatprep.subr.mxu0 0.0
      %493 = vmatpush1.msra.mxu0 0.0
      %494 = vmatprep.subr.mxu0 0.0
      %495 = vmatpush1.msra.mxu0 0.0
      %496 = vmatprep.subr.mxu0 0.0
      %497 = vmatpush1.msra.mxu0 0.0
      %498 = vmatprep.subr.mxu0 0.0
      %499 = vmatpush1.msra.mxu0 0.0
      %500 = vmatprep.subr.mxu0 0.0
      %501 = vmatpush1.msra.mxu0 0.0
      %502 = vmatprep.subr.mxu0 0.0
      %503 = vmatpush1.msra.mxu0 0.0
      %504 = vmatprep.subr.mxu0 0.0
      %505 = vmatpush1.msra.mxu0 0.0
      %506 = vmatprep.subr.mxu0 0.0
      %507 = vmatpush1.msra.mxu0 0.0
      %508 = vmatprep.subr.mxu0 0.0
      %509 = vmatpush1.msra.mxu0 0.0
      %510 = vmatprep.subr.mxu0 0.0
      %511 = vmatpush1.msra.mxu0 0.0
      %512 = vmatprep.subr.mxu0 0.0
      %513 = vmatpush1.msra.mxu0 0.0
      %514 = vmatprep.subr.mxu0 0.0
      %515 = vmatpush1.msra.mxu0 0.0
      %516 = vmatprep.mubr.f32.mxu0 0.0
      %517 = vmatmul.mubr.f32.gmra.mrb[0].mxu0 %v451
      %v518 = vpop.f32.mrb[0].mxu0
      %v519 = vadd.f32 0.0, %v518
      %v520 = vpop.f32.mrb[0].mxu0
      %v521 = vadd.f32 0.0, %v520
      %522 = vdwg.mxu0
      %v525 = vcombine.low %v519, %v521
      %v527 = vunpack.c.l.s4 1966171168
      %v528 = vunpack.c.0.s8 %v527
      %v529 = vlaneseq
      %v530 = vshrl.u32 %v529, 7
      %v531 = vsub.s32 %v528, %v530
      %v532 = vrot.slane %v525, %v531
      %v534 = vunpack.c.l.s4 1966171168
      %v535 = vunpack.c.0.s8 %v534
      %v536 = vlaneseq
      %v537 = vshrl.u32 %v536, 7
      %v538 = vsub.s32 %v535, %v537
      %v539 = vrot.slane %v532, %v538
      %v541 = vadd.f32 %v450, %v539
      %v542 = vlaneseq
      %vm543 = vcmp.ge.s32.totalorder %v542, 0
      %vm544 = vcmp.lt.s32.totalorder %v542, 256
      %vm545 = vmand %vm543, %vm544
      %546 = vst.msk [vmem:[#allocation2] sm:$0x3] %vm545, %v541
      // Predicated region
      $region45: #{udf_edge_weight_norm.3} parent=39 // pred_check
        %p547 = pneg %p336
      $region46: #{udf_edge_weight_norm.3} parent=39 // pred_check_branch
        %549 = sbr.rel (%p547) target = $region48
      $region47: #{udf_edge_weight_norm.3} parent=39 // pred_region
        %550 = vst.msk [vmem:[#allocation3] sm:$0x3] %vm545, 0.0
      $region48: #{udf_edge_weight_norm.3} parent=39 // pred_fallthru
        _
      %v551 = vld [vmem:[%s283] sm:$0x3]
      %v552 = vlaneseq
      %v553 = vshrl.u32 %v552, 7
      %v554 = vsub.s32 0, %v553
      %v555 = vrot.slane %v551, %v554
      %v556 = vlaneseq
      %v557 = vshrl.u32 %v556, 7
      %v558 = vsub.s32 1, %v557
      %v559 = vrot.slane %v551, %v558
      %vm560 = vcmp.eq.s32.totalorder %v320, %v555
      %vm561 = vcmp.eq.s32.totalorder %v320, %v559
      %vm562 = vcmp.eq.s32.totalorder %v321, %v555
      %vm563 = vcmp.eq.s32.totalorder %v321, %v559
      %vm564 = vcmp.eq.s32.totalorder %v322, %v555
      %vm565 = vcmp.eq.s32.totalorder %v322, %v559
      %vm566 = vcmp.eq.s32.totalorder %v323, %v555
      %vm567 = vcmp.eq.s32.totalorder %v323, %v559
      %vm568 = vcmp.eq.s32.totalorder %v324, %v555
      %vm569 = vcmp.eq.s32.totalorder %v324, %v559
      %vm570 = vcmp.eq.s32.totalorder %v325, %v555
      %vm571 = vcmp.eq.s32.totalorder %v325, %v559
      %vm572 = vcmp.eq.s32.totalorder %v326, %v555
      %vm573 = vcmp.eq.s32.totalorder %v326, %v559
      %vm574 = vcmp.eq.s32.totalorder %v327, %v555
      %vm575 = vcmp.eq.s32.totalorder %v327, %v559
      %vm576 = vcmp.eq.s32.totalorder %v328, %v555
      %vm577 = vcmp.eq.s32.totalorder %v328, %v559
      %vm578 = vcmp.eq.s32.totalorder %v329, %v555
      %vm579 = vcmp.eq.s32.totalorder %v329, %v559
      %vm580 = vcmp.eq.s32.totalorder %v330, %v555
      %vm581 = vcmp.eq.s32.totalorder %v330, %v559
      %vm582 = vcmp.eq.s32.totalorder %v331, %v555
      %vm583 = vcmp.eq.s32.totalorder %v331, %v559
      %vm584 = vcmp.eq.s32.totalorder %v332, %v555
      %vm585 = vcmp.eq.s32.totalorder %v332, %v559
      %vm586 = vcmp.eq.s32.totalorder %v333, %v555
      %vm587 = vcmp.eq.s32.totalorder %v333, %v559
      %vm588 = vcmp.eq.s32.totalorder %v334, %v555
      %vm589 = vcmp.eq.s32.totalorder %v334, %v559
      %vm590 = vcmp.eq.s32.totalorder %v335, %v555
      %vm591 = vcmp.eq.s32.totalorder %v335, %v559
      %v592 = vsel %vm560, 1, 0
      %v593 = vsel %vm561, 1, 0
      %v594 = vsel %vm562, 1, 0
      %v595 = vsel %vm563, 1, 0
      %v596 = vsel %vm564, 1, 0
      %v597 = vsel %vm565, 1, 0
      %v598 = vsel %vm566, 1, 0
      %v599 = vsel %vm567, 1, 0
      %v600 = vsel %vm568, 1, 0
      %v601 = vsel %vm569, 1, 0
      %v602 = vsel %vm570, 1, 0
      %v603 = vsel %vm571, 1, 0
      %v604 = vsel %vm572, 1, 0
      %v605 = vsel %vm573, 1, 0
      %v606 = vsel %vm574, 1, 0
      %v607 = vsel %vm575, 1, 0
      %v608 = vsel %vm576, 1, 0
      %v609 = vsel %vm577, 1, 0
      %v610 = vsel %vm578, 1, 0
      %v611 = vsel %vm579, 1, 0
      %v612 = vsel %vm580, 1, 0
      %v613 = vsel %vm581, 1, 0
      %v614 = vsel %vm582, 1, 0
      %v615 = vsel %vm583, 1, 0
      %v616 = vsel %vm584, 1, 0
      %v617 = vsel %vm585, 1, 0
      %v618 = vsel %vm586, 1, 0
      %v619 = vsel %vm587, 1, 0
      %v620 = vsel %vm588, 1, 0
      %v621 = vsel %vm589, 1, 0
      %v622 = vsel %vm590, 1, 0
      %v623 = vsel %vm591, 1, 0
      %v624 = vcvt.s32.f32 %v592
      %v625 = vcvt.s32.f32 %v593
      %v626 = vcvt.s32.f32 %v594
      %v627 = vcvt.s32.f32 %v595
      %v628 = vcvt.s32.f32 %v596
      %v629 = vcvt.s32.f32 %v597
      %v630 = vcvt.s32.f32 %v598
      %v631 = vcvt.s32.f32 %v599
      %v632 = vcvt.s32.f32 %v600
      %v633 = vcvt.s32.f32 %v601
      %v634 = vcvt.s32.f32 %v602
      %v635 = vcvt.s32.f32 %v603
      %v636 = vcvt.s32.f32 %v604
      %v637 = vcvt.s32.f32 %v605
      %v638 = vcvt.s32.f32 %v606
      %v639 = vcvt.s32.f32 %v607
      %v640 = vcvt.s32.f32 %v608
      %v641 = vcvt.s32.f32 %v609
      %v642 = vcvt.s32.f32 %v610
      %v643 = vcvt.s32.f32 %v611
      %v644 = vcvt.s32.f32 %v612
      %v645 = vcvt.s32.f32 %v613
      %v646 = vcvt.s32.f32 %v614
      %v647 = vcvt.s32.f32 %v615
      %v648 = vcvt.s32.f32 %v616
      %v649 = vcvt.s32.f32 %v617
      %v650 = vcvt.s32.f32 %v618
      %v651 = vcvt.s32.f32 %v619
      %v652 = vcvt.s32.f32 %v620
      %v653 = vcvt.s32.f32 %v621
      %v654 = vcvt.s32.f32 %v622
      %v655 = vcvt.s32.f32 %v623
      %v656 = vld [vmem:[#allocation3] sm:$0x3]
      %v657 = vld [vmem:[%s295] sm:$0x1]
      %658 = vmatprep.subr.mxu0 %v625
      %659 = vmatpush1.msra.mxu0 %v624
      %660 = vmatprep.subr.mxu0 %v627
      %661 = vmatpush1.msra.mxu0 %v626
      %662 = vmatprep.subr.mxu0 %v629
      %663 = vmatpush1.msra.mxu0 %v628
      %664 = vmatprep.subr.mxu0 %v631
      %665 = vmatpush1.msra.mxu0 %v630
      %666 = vmatprep.subr.mxu0 %v633
      %667 = vmatpush1.msra.mxu0 %v632
      %668 = vmatprep.subr.mxu0 %v635
      %669 = vmatpush1.msra.mxu0 %v634
      %670 = vmatprep.subr.mxu0 %v637
      %671 = vmatpush1.msra.mxu0 %v636
      %672 = vmatprep.subr.mxu0 %v639
      %673 = vmatpush1.msra.mxu0 %v638
      %674 = vmatprep.subr.mxu0 %v641
      %675 = vmatpush1.msra.mxu0 %v640
      %676 = vmatprep.subr.mxu0 %v643
      %677 = vmatpush1.msra.mxu0 %v642
      %678 = vmatprep.subr.mxu0 %v645
      %679 = vmatpush1.msra.mxu0 %v644
      %680 = vmatprep.subr.mxu0 %v647
      %681 = vmatpush1.msra.mxu0 %v646
      %682 = vmatprep.subr.mxu0 %v649
      %683 = vmatpush1.msra.mxu0 %v648
      %684 = vmatprep.subr.mxu0 %v651
      %685 = vmatpush1.msra.mxu0 %v650
      %686 = vmatprep.subr.mxu0 %v653
      %687 = vmatpush1.msra.mxu0 %v652
      %688 = vmatprep.subr.mxu0 %v655
      %689 = vmatpush1.msra.mxu0 %v654
      %690 = vmatprep.subr.mxu0 0.0
      %691 = vmatpush1.msra.mxu0 0.0
      %692 = vmatprep.subr.mxu0 0.0
      %693 = vmatpush1.msra.mxu0 0.0
      %694 = vmatprep.subr.mxu0 0.0
      %695 = vmatpush1.msra.mxu0 0.0
      %696 = vmatprep.subr.mxu0 0.0
      %697 = vmatpush1.msra.mxu0 0.0
      %698 = vmatprep.subr.mxu0 0.0
      %699 = vmatpush1.msra.mxu0 0.0
      %700 = vmatprep.subr.mxu0 0.0
      %701 = vmatpush1.msra.mxu0 0.0
      %702 = vmatprep.subr.mxu0 0.0
      %703 = vmatpush1.msra.mxu0 0.0
      %704 = vmatprep.subr.mxu0 0.0
      %705 = vmatpush1.msra.mxu0 0.0
      %706 = vmatprep.subr.mxu0 0.0
      %707 = vmatpush1.msra.mxu0 0.0
      %708 = vmatprep.subr.mxu0 0.0
      %709 = vmatpush1.msra.mxu0 0.0
      %710 = vmatprep.subr.mxu0 0.0
      %711 = vmatpush1.msra.mxu0 0.0
      %712 = vmatprep.subr.mxu0 0.0
      %713 = vmatpush1.msra.mxu0 0.0
      %714 = vmatprep.subr.mxu0 0.0
      %715 = vmatpush1.msra.mxu0 0.0
      %716 = vmatprep.subr.mxu0 0.0
      %717 = vmatpush1.msra.mxu0 0.0
      %718 = vmatprep.subr.mxu0 0.0
      %719 = vmatpush1.msra.mxu0 0.0
      %720 = vmatprep.subr.mxu0 0.0
      %721 = vmatpush1.msra.mxu0 0.0
      %722 = vmatprep.mubr.f32.mxu0 0.0
      %723 = vmatmul.mubr.f32.gmra.mrb[0].mxu0 %v657
      %v724 = vpop.f32.mrb[0].mxu0
      %v725 = vadd.f32 0.0, %v724
      %v726 = vpop.f32.mrb[0].mxu0
      %v727 = vadd.f32 0.0, %v726
      %728 = vdwg.mxu0
      %v731 = vcombine.low %v725, %v727
      %v733 = vunpack.c.l.s4 1966171168
      %v734 = vunpack.c.0.s8 %v733
      %v735 = vlaneseq
      %v736 = vshrl.u32 %v735, 7
      %v737 = vsub.s32 %v734, %v736
      %v738 = vrot.slane %v731, %v737
      %v740 = vunpack.c.l.s4 1966171168
      %v741 = vunpack.c.0.s8 %v740
      %v742 = vlaneseq
      %v743 = vshrl.u32 %v742, 7
      %v744 = vsub.s32 %v741, %v743
      %v745 = vrot.slane %v738, %v744
      %v747 = vadd.f32 %v656, %v745
      %748 = vst.msk [vmem:[#allocation3] sm:$0x3] %vm545, %v747
      %p749 = scmp.eq.s32.totalorder %s21, 1
      // Predicated region
      $region49: #{udf_edge_weight_norm.3} parent=39 // pred_check
        %p750 = pneg %p749
      $region50: #{udf_edge_weight_norm.3} parent=39 // pred_check_branch
        %752 = sbr.rel (%p750) target = $region52
      $region51: #{udf_edge_weight_norm.3} parent=39 // pred_region
        %v753 = vld [vmem:[%s288] sm:$0x3]
        %v754 = vld [vmem:[#allocation2] sm:$0x3]
        %v755 = vmul.f32 %v753, %v754
        %v756 = vld [vmem:[#allocation3] sm:$0x3]
        %v757 = vmul.f32 %v755, %v756
        %758 = vst.msk [vmem:[%s299] sm:$0x3] %vm545, %v757
      $region52: #{udf_edge_weight_norm.3} parent=39 // pred_fallthru
        _
      %s759 = smul.u32 2, %s20
      %p760 = scmp.lt.s32.totalorder %s759, 5
      %s761 = scalar_select %p760, %s759, 5
      %s762 = scalar_lea.vmem %s5, %s761
      // Predicated region
      $region53: #{udf_edge_weight_norm.3} parent=39 // pred_check
        %p763 = pneg %p176
      $region54: #{udf_edge_weight_norm.3} parent=39 // pred_check_branch
        %765 = sbr.rel (%p763) target = $region56
      $region55: #{udf_edge_weight_norm.3} parent=39 // pred_region
        %s766 = smul.u32 2, %s20
      $region56: #{udf_edge_weight_norm.3} parent=39 // pred_fallthru
        _
    $region40: #{udf_edge_weight_norm.3} parent=5 // pred_fallthru
      _
    %p767 = scmp.le.s32.totalorder 2, %s11
    // Predicated region
    $region57: #{udf_edge_weight_norm.3} parent=5 // pred_check
      %p768 = pneg %p767
    $region58: #{udf_edge_weight_norm.3} parent=5 // pred_check_branch
      %770 = sbr.rel (%p768) target = $region60
    $region59: #{udf_edge_weight_norm.3} parent=5 // pred_region
      %s771 = ssub.s32 %s11, 2
      // Predicated region
      $region61: #{udf_edge_weight_norm.3} parent=59 // pred_check
        %p772 = pneg %p182
      $region62: #{udf_edge_weight_norm.3} parent=59 // pred_check_branch
        %774 = sbr.rel (%p772) target = $region64
      $region63: #{udf_edge_weight_norm.3} parent=59 // pred_region
        %s775 = smul.u32 2, %s22
        %p776 = scmp.lt.s32.totalorder %s775, 5
        %s777 = scalar_select %p776, %s775, 5
        %s778 = scalar_lea.vmem %s5, %s777
      $region64: #{udf_edge_weight_norm.3} parent=59 // pred_fallthru
        _
    $region60: #{udf_edge_weight_norm.3} parent=5 // pred_fallthru
      _
  $region6: #{udf_edge_weight_norm.3} parent=0 // loop_footer
    %s15 = sadd.s32 1, %s11
  $region7: #{udf_edge_weight_norm.3} parent=0 // loop_footer_branch
    %10 = sbr.rel target = $region3
  $region8: #{udf_edge_weight_norm.3} parent=0 // loop_exit
    _

// kernel: udf_edge_weight_norm.2
$region0: #{udf_edge_weight_norm.2}
  #allocation0 [shape = 'u32[]', space=smem, size = 0x4, offset = 0x4, fixed_abs, tag = 'smem constant byte address 0x4 - core index']
  #allocation1 [shape = 'u32[144,128]{1,0:T(1,128)}', space=vmem, size = 0x12000, scoped, tag = 'internal scratch']
  %s0 = inlined_call_operand.vmem [shape: s32[768,1], index: 0, kind: input, shape index: {}]
  %s1 = inlined_call_operand.vmem [shape: s32[768,1], index: 1, kind: input, shape index: {}]
  %s2 = inlined_call_operand.vmem [shape: f32[1,768], index: 2, kind: input, shape index: {}]
  %s3 = inlined_call_operand.vmem [shape: f32[1,256], index: 3, kind: output, shape index: {0}]
  %s4 = inlined_call_operand.vmem [shape: f32[1,256], index: 4, kind: output, shape index: {1}]
  %5 = xla_tuple %s3, %s4
  %s6 = sld [smem:[#allocation0]]
  $region69: #{udf_edge_weight_norm.2} parent=0
    _
  %s8 = ssub.s32 1, %s6
  %s9 = scalar_select 0, %s8, %s6
  loop: start=0, step=1, limit=8
  $region2: #{udf_edge_weight_norm.2} parent=0 // loop_pre_header
    _
  $region3: #{udf_edge_weight_norm.2} parent=0 // loop_header
    %s11 = sphi 0, %s15
    %p12 = scmp.ge.s32.totalorder %s11, 8
    %s18 = sphi 0, %s30
    %s19 = sphi 0, %s26
    %s20 = sphi 0, %s18
    %s21 = sphi 0, %s19
    %s22 = sphi 0, %s20
    %s23 = sphi 0, %s21
    %s33 = sphi 0, %s35
    %s36 = sphi 0, %s33
    %s37 = sphi 0, %s36
    %s53 = sphi 0, %s37
    %s59 = sphi 0, %s61
    %s62 = sphi 0, %s59
    %s63 = sphi 0, %s62
    %s79 = sphi 0, %s63
    %s85 = sphi 0, %s87
    %s88 = sphi 0, %s85
    %s89 = sphi 0, %s88
    %s105 = sphi 0, %s89
    %s111 = sphi 0, %s113
    %s114 = sphi 0, %s111
    %s115 = sphi 0, %s114
    %s131 = sphi 0, %s115
    %s137 = sphi 0, %s139
    %s140 = sphi 0, %s137
    %s141 = sphi 0, %s140
    %s157 = sphi 0, %s141
  $region4: #{udf_edge_weight_norm.2} parent=0 // loop_header_branch
    %14 = sbr.rel (%p12) target = $region8
  $region5: #{udf_edge_weight_norm.2} parent=0 // loop_body
    %s16 = ssub.s32 %s11, 1
    %s17 = ssub.s32 %s11, 2
    %s24 = sadd.s32 1, %s19
    %p25 = scmp.ge.s32.totalorder %s24, 3
    %s26 = scalar_select %p25, 0, %s24
    %s27 = sadd.s32 1, %s18
    %s28 = scalar_select %p25, %s27, %s18
    %p29 = scmp.ge.s32.totalorder %s28, 2
    %s30 = scalar_select %p29, 0, %s28
    %s31 = ssub.s32 %s19, %s26
    %p32 = scmp.eq.s32.totalorder %s31, 0
    %s34 = sadd.s32 %s33, 1
    %s35 = scalar_select %p32, %s33, %s34
    %p38 = pneg %p32
    %p39 = scmp.eq.s32.totalorder %s11, 5
    %p40 = por %p38, %p39
    %p41 = scmp.ne.s32.totalorder %s33, %s36
    %p42 = scmp.eq.s32.totalorder %s11, 0
    %p43 = por %p41, %p42
    %p44 = scmp.ne.s32.totalorder %s33, %s36
    %p45 = scmp.eq.s32.totalorder %s16, 5
    %p46 = por %p44, %p45
    %p47 = scmp.ne.s32.totalorder %s36, %s37
    %p48 = scmp.eq.s32.totalorder %s16, 0
    %p49 = por %p47, %p48
    %p50 = scmp.ne.s32.totalorder %s36, %s37
    %p51 = scmp.eq.s32.totalorder %s17, 5
    %p52 = por %p50, %p51
    %p54 = scmp.ne.s32.totalorder %s37, %s53
    %p55 = scmp.eq.s32.totalorder %s17, 0
    %p56 = por %p54, %p55
    %s57 = ssub.s32 %s19, %s26
    %p58 = scmp.eq.s32.totalorder %s57, 0
    %s60 = sadd.s32 %s59, 1
    %s61 = scalar_select %p58, %s59, %s60
    %p64 = pneg %p58
    %p65 = scmp.eq.s32.totalorder %s11, 5
    %p66 = por %p64, %p65
    %p67 = scmp.ne.s32.totalorder %s59, %s62
    %p68 = scmp.eq.s32.totalorder %s11, 0
    %p69 = por %p67, %p68
    %p70 = scmp.ne.s32.totalorder %s59, %s62
    %p71 = scmp.eq.s32.totalorder %s16, 5
    %p72 = por %p70, %p71
    %p73 = scmp.ne.s32.totalorder %s62, %s63
    %p74 = scmp.eq.s32.totalorder %s16, 0
    %p75 = por %p73, %p74
    %p76 = scmp.ne.s32.totalorder %s62, %s63
    %p77 = scmp.eq.s32.totalorder %s17, 5
    %p78 = por %p76, %p77
    %p80 = scmp.ne.s32.totalorder %s63, %s79
    %p81 = scmp.eq.s32.totalorder %s17, 0
    %p82 = por %p80, %p81
    %s83 = ssub.s32 %s19, %s26
    %p84 = scmp.eq.s32.totalorder %s83, 0
    %s86 = sadd.s32 %s85, 1
    %s87 = scalar_select %p84, %s85, %s86
    %p90 = pneg %p84
    %p91 = scmp.eq.s32.totalorder %s11, 5
    %p92 = por %p90, %p91
    %p93 = scmp.ne.s32.totalorder %s85, %s88
    %p94 = scmp.eq.s32.totalorder %s11, 0
    %p95 = por %p93, %p94
    %p96 = scmp.ne.s32.totalorder %s85, %s88
    %p97 = scmp.eq.s32.totalorder %s16, 5
    %p98 = por %p96, %p97
    %p99 = scmp.ne.s32.totalorder %s88, %s89
    %p100 = scmp.eq.s32.totalorder %s16, 0
    %p101 = por %p99, %p100
    %p102 = scmp.ne.s32.totalorder %s88, %s89
    %p103 = scmp.eq.s32.totalorder %s17, 5
    %p104 = por %p102, %p103
    %p106 = scmp.ne.s32.totalorder %s89, %s105
    %p107 = scmp.eq.s32.totalorder %s17, 0
    %p108 = por %p106, %p107
    %s109 = ssub.s32 %s18, %s30
    %p110 = scmp.eq.s32.totalorder %s109, 0
    %s112 = sadd.s32 %s111, 1
    %s113 = scalar_select %p110, %s111, %s112
    %p116 = pneg %p110
    %p117 = scmp.eq.s32.totalorder %s11, 5
    %p118 = por %p116, %p117
    %p119 = scmp.ne.s32.totalorder %s111, %s114
    %p120 = scmp.eq.s32.totalorder %s11, 0
    %p121 = por %p119, %p120
    %p122 = scmp.ne.s32.totalorder %s111, %s114
    %p123 = scmp.eq.s32.totalorder %s16, 5
    %p124 = por %p122, %p123
    %p125 = scmp.ne.s32.totalorder %s114, %s115
    %p126 = scmp.eq.s32.totalorder %s16, 0
    %p127 = por %p125, %p126
    %p128 = scmp.ne.s32.totalorder %s114, %s115
    %p129 = scmp.eq.s32.totalorder %s17, 5
    %p130 = por %p128, %p129
    %p132 = scmp.ne.s32.totalorder %s115, %s131
    %p133 = scmp.eq.s32.totalorder %s17, 0
    %p134 = por %p132, %p133
    %s135 = ssub.s32 %s18, %s30
    %p136 = scmp.eq.s32.totalorder %s135, 0
    %s138 = sadd.s32 %s137, 1
    %s139 = scalar_select %p136, %s137, %s138
    %p142 = pneg %p136
    %p143 = scmp.eq.s32.totalorder %s11, 5
    %p144 = por %p142, %p143
    %p145 = scmp.ne.s32.totalorder %s137, %s140
    %p146 = scmp.eq.s32.totalorder %s11, 0
    %p147 = por %p145, %p146
    %p148 = scmp.ne.s32.totalorder %s137, %s140
    %p149 = scmp.eq.s32.totalorder %s16, 5
    %p150 = por %p148, %p149
    %p151 = scmp.ne.s32.totalorder %s140, %s141
    %p152 = scmp.eq.s32.totalorder %s16, 0
    %p153 = por %p151, %p152
    %p154 = scmp.ne.s32.totalorder %s140, %s141
    %p155 = scmp.eq.s32.totalorder %s17, 5
    %p156 = por %p154, %p155
    %p158 = scmp.ne.s32.totalorder %s141, %s157
    %p159 = scmp.eq.s32.totalorder %s17, 0
    %p160 = por %p158, %p159
    %p161 = scmp.le.s32.totalorder 1, %s11
    %p162 = scmp.lt.s32.totalorder %s11, 7
    %p163 = pnand %p161, %p162
    %p164 = pneg %p163
    // Predicated region
    $region9: #{udf_edge_weight_norm.2} parent=5 // pred_check
      _
    $region10: #{udf_edge_weight_norm.2} parent=5 // pred_check_branch
      %166 = sbr.rel (%p163) target = $region12
    $region11: #{udf_edge_weight_norm.2} parent=5 // pred_region
      %s167 = ssub.s32 %s11, 1
    $region12: #{udf_edge_weight_norm.2} parent=5 // pred_fallthru
      _
    %p168 = scmp.lt.s32.totalorder %s11, 6
    // Predicated region
    $region13: #{udf_edge_weight_norm.2} parent=5 // pred_check
      %p169 = pneg %p168
    $region14: #{udf_edge_weight_norm.2} parent=5 // pred_check_branch
      %171 = sbr.rel (%p169) target = $region16
    $region15: #{udf_edge_weight_norm.2} parent=5 // pred_region
      // Predicated region
      $region17: #{udf_edge_weight_norm.2} parent=15 // pred_check
        %p172 = pneg %p43
      $region18: #{udf_edge_weight_norm.2} parent=15 // pred_check_branch
        %174 = sbr.rel (%p172) target = $region20
      $region19: #{udf_edge_weight_norm.2} parent=15 // pred_region
        %s175 = smul.u32 32, %s19
        %p176 = scmp.lt.s32.totalorder %s175, 95
        %s177 = scalar_select %p176, %s175, 95
        %s178 = smul.addr %s177, 8
        %s179 = scalar_lea.vmem %s0, %s178
        %s180 = smul.u32 32, %s19
      $region20: #{udf_edge_weight_norm.2} parent=15 // pred_fallthru
        _
      // Predicated region
      $region21: #{udf_edge_weight_norm.2} parent=15 // pred_check
        %p181 = pneg %p69
      $region22: #{udf_edge_weight_norm.2} parent=15 // pred_check_branch
        %183 = sbr.rel (%p181) target = $region24
      $region23: #{udf_edge_weight_norm.2} parent=15 // pred_region
        %s184 = smul.u32 32, %s19
        %p185 = scmp.lt.s32.totalorder %s184, 95
        %s186 = scalar_select %p185, %s184, 95
        %s187 = smul.addr %s186, 8
        %s188 = scalar_lea.vmem %s1, %s187
        %s189 = smul.u32 32, %s19
      $region24: #{udf_edge_weight_norm.2} parent=15 // pred_fallthru
        _
      // Predicated region
      $region25: #{udf_edge_weight_norm.2} parent=15 // pred_check
        %p190 = pneg %p95
      $region26: #{udf_edge_weight_norm.2} parent=15 // pred_check_branch
        %192 = sbr.rel (%p190) target = $region28
      $region27: #{udf_edge_weight_norm.2} parent=15 // pred_region
        %s193 = smul.u32 2, %s19
        %p194 = scmp.lt.s32.totalorder %s193, 5
        %s195 = scalar_select %p194, %s193, 5
        %s196 = scalar_lea.vmem %s2, %s195
        %s197 = smul.u32 2, %s19
      $region28: #{udf_edge_weight_norm.2} parent=15 // pred_fallthru
        _
    $region16: #{udf_edge_weight_norm.2} parent=5 // pred_fallthru
      _
    %p198 = scmp.le.s32.totalorder 1, %s11
    %p199 = scmp.lt.s32.totalorder %s11, 7
    %p200 = pnand %p198, %p199
    %p201 = pneg %p200
    // Predicated region
    $region29: #{udf_edge_weight_norm.2} parent=5 // pred_check
      _
    $region30: #{udf_edge_weight_norm.2} parent=5 // pred_check_branch
      %203 = sbr.rel (%p200) target = $region32
    $region31: #{udf_edge_weight_norm.2} parent=5 // pred_region
      %s204 = ssub.s32 %s11, 1
      %s205 = smul.u32 32, %s21
      %p206 = scmp.lt.s32.totalorder %s205, 95
      %s207 = scalar_select %p206, %s205, 95
      %s208 = smul.addr %s207, 8
      %s209 = scalar_lea.vmem %s0, %s208
      %p210 = pneg %p49
      %p211 = pneg %p46
      %s212 = smul.u32 32, %s21
      %p213 = scmp.lt.s32.totalorder %s212, 95
      %s214 = scalar_select %p213, %s212, 95
      %s215 = smul.addr %s214, 8
      %s216 = scalar_lea.vmem %s1, %s215
      %p217 = pneg %p75
      %p218 = pneg %p72
      %s219 = smul.u32 2, %s21
      %p220 = scmp.lt.s32.totalorder %s219, 5
      %s221 = scalar_select %p220, %s219, 5
      %s222 = scalar_lea.vmem %s2, %s221
      %p223 = pneg %p101
      %p224 = pneg %p98
      %p225 = pneg %p127
      %p226 = pneg %p124
      %p227 = scmp.lt.s32.totalorder %s20, 1
      %s228 = scalar_select %p227, %s20, 1
      %s229 = scalar_lea.vmem %s3, %s228
      %p230 = pneg %p153
      %p231 = pneg %p150
      %p232 = scmp.lt.s32.totalorder %s20, 1
      %s233 = scalar_select %p232, %s20, 1
      %s234 = scalar_lea.vmem %s4, %s233
      %s235 = smul.u32 32, %s21
      %p236 = scmp.lt.s32.totalorder %s235, 95
      %s237 = scalar_select %p236, %s235, 95
      %s238 = smul.addr %s237, 8
      %s239 = scalar_lea.vmem %s0, %s238
      %s240 = smul.u32 32, %s21
      %s241 = smul.u32 32, %s21
      %p242 = scmp.lt.s32.totalorder %s241, 95
      %s243 = scalar_select %p242, %s241, 95
      %s244 = smul.addr %s243, 8
      %s245 = scalar_lea.vmem %s1, %s244
      %s246 = smul.u32 32, %s21
      %s247 = smul.u32 2, %s21
      %p248 = scmp.lt.s32.totalorder %s247, 5
      %s249 = scalar_select %p248, %s247, 5
      %s250 = scalar_lea.vmem %s2, %s249
      %s251 = smul.u32 2, %s21
      %p252 = scmp.lt.s32.totalorder %s20, 1
      %s253 = scalar_select %p252, %s20, 1
      %s254 = scalar_lea.vmem %s3, %s253
      %p255 = scmp.lt.s32.totalorder %s20, 1
      %s256 = scalar_select %p255, %s20, 1
      %s257 = scalar_lea.vmem %s4, %s256
      %v258 = vld [vmem:[%s250] sm:$0x3]
      %v259 = vlaneseq
      %v260 = vand.u32 %v259, 127
      %s261 = smul.u32 %s20, 128
      %v262 = vstv %s261
      %v263 = vadd.s32 %v260, %v262
      %p264 = scmp.eq.s32.totalorder %s21, 0
      // Predicated region
      $region33: #{udf_edge_weight_norm.2} parent=31 // pred_check
        %p265 = pneg %p264
      $region34: #{udf_edge_weight_norm.2} parent=31 // pred_check_branch
        %267 = sbr.rel (%p265) target = $region36
      $region35: #{udf_edge_weight_norm.2} parent=31 // pred_region
        %268 = vst [vmem:[%s254] sm:$0x1] 0.0
      $region36: #{udf_edge_weight_norm.2} parent=31 // pred_fallthru
        _
      %v269 = vld [vmem:[%s239] sm:$0xff]
      %v270 = vld [vmem:[%s239 + $0x8] sm:$0xff]
      %v271 = vld [vmem:[%s239 + $0x10] sm:$0xff]
      %v272 = vld [vmem:[%s239 + $0x18] sm:$0xff]
      %v273 = vld [vmem:[%s239 + $0x20] sm:$0xff]
      %v274 = vld [vmem:[%s239 + $0x28] sm:$0xff]
      %v275 = vld [vmem:[%s239 + $0x30] sm:$0xff]
      %v276 = vld [vmem:[%s239 + $0x38] sm:$0xff]
      %v277 = vld [vmem:[%s239 + $0x40] sm:$0xff]
      %v278 = vld [vmem:[%s239 + $0x48] sm:$0xff]
      %v279 = vld [vmem:[%s239 + $0x50] sm:$0xff]
      %v280 = vld [vmem:[%s239 + $0x58] sm:$0xff]
      %v281 = vld [vmem:[%s239 + $0x60] sm:$0xff]
      %v282 = vld [vmem:[%s239 + $0x68] sm:$0xff]
      %v283 = vld [vmem:[%s239 + $0x70] sm:$0xff]
      %v284 = vld [vmem:[%s239 + $0x78] sm:$0xff]
      %v285 = vld [vmem:[%s239 + $0x80] sm:$0xff]
      %v286 = vld [vmem:[%s239 + $0x88] sm:$0xff]
      %v287 = vld [vmem:[%s239 + $0x90] sm:$0xff]
      %v288 = vld [vmem:[%s239 + $0x98] sm:$0xff]
      %v289 = vld [vmem:[%s239 + $0xa0] sm:$0xff]
      %v290 = vld [vmem:[%s239 + $0xa8] sm:$0xff]
      %v291 = vld [vmem:[%s239 + $0xb0] sm:$0xff]
      %v292 = vld [vmem:[%s239 + $0xb8] sm:$0xff]
      %v293 = vld [vmem:[%s239 + $0xc0] sm:$0xff]
      %v294 = vld [vmem:[%s239 + $0xc8] sm:$0xff]
      %v295 = vld [vmem:[%s239 + $0xd0] sm:$0xff]
      %v296 = vld [vmem:[%s239 + $0xd8] sm:$0xff]
      %v297 = vld [vmem:[%s239 + $0xe0] sm:$0xff]
      %v298 = vld [vmem:[%s239 + $0xe8] sm:$0xff]
      %v299 = vld [vmem:[%s239 + $0xf0] sm:$0xff]
      %v300 = vld [vmem:[%s239 + $0xf8] sm:$0xff]
      %301 = vset.pattern.permute.xlu0 0
      %302 = vperm.xlu0 %301, %v269
      %v303 = vpop.permute.xlu0 %302
      %304 = vset.pattern.permute.xlu0 0
      %305 = vperm.xlu0 %304, %v270
      %v306 = vpop.permute.xlu0 %305
      %307 = vset.pattern.permute.xlu0 0
      %308 = vperm.xlu0 %307, %v271
      %v309 = vpop.permute.xlu0 %308
      %310 = vset.pattern.permute.xlu0 0
      %311 = vperm.xlu0 %310, %v272
      %v312 = vpop.permute.xlu0 %311
      %313 = vset.pattern.permute.xlu0 0
      %314 = vperm.xlu0 %313, %v273
      %v315 = vpop.permute.xlu0 %314
      %316 = vset.pattern.permute.xlu0 0
      %317 = vperm.xlu0 %316, %v274
      %v318 = vpop.permute.xlu0 %317
      %319 = vset.pattern.permute.xlu0 0
      %320 = vperm.xlu0 %319, %v275
      %v321 = vpop.permute.xlu0 %320
      %322 = vset.pattern.permute.xlu0 0
      %323 = vperm.xlu0 %322, %v276
      %v324 = vpop.permute.xlu0 %323
      %325 = vset.pattern.permute.xlu0 0
      %326 = vperm.xlu0 %325, %v277
      %v327 = vpop.permute.xlu0 %326
      %328 = vset.pattern.permute.xlu0 0
      %329 = vperm.xlu0 %328, %v278
      %v330 = vpop.permute.xlu0 %329
      %331 = vset.pattern.permute.xlu0 0
      %332 = vperm.xlu0 %331, %v279
      %v333 = vpop.permute.xlu0 %332
      %334 = vset.pattern.permute.xlu0 0
      %335 = vperm.xlu0 %334, %v280
      %v336 = vpop.permute.xlu0 %335
      %337 = vset.pattern.permute.xlu0 0
      %338 = vperm.xlu0 %337, %v281
      %v339 = vpop.permute.xlu0 %338
      %340 = vset.pattern.permute.xlu0 0
      %341 = vperm.xlu0 %340, %v282
      %v342 = vpop.permute.xlu0 %341
      %343 = vset.pattern.permute.xlu0 0
      %344 = vperm.xlu0 %343, %v283
      %v345 = vpop.permute.xlu0 %344
      %346 = vset.pattern.permute.xlu0 0
      %347 = vperm.xlu0 %346, %v284
      %v348 = vpop.permute.xlu0 %347
      %349 = vset.pattern.permute.xlu0 0
      %350 = vperm.xlu0 %349, %v285
      %v351 = vpop.permute.xlu0 %350
      %352 = vset.pattern.permute.xlu0 0
      %353 = vperm.xlu0 %352, %v286
      %v354 = vpop.permute.xlu0 %353
      %355 = vset.pattern.permute.xlu0 0
      %356 = vperm.xlu0 %355, %v287
      %v357 = vpop.permute.xlu0 %356
      %358 = vset.pattern.permute.xlu0 0
      %359 = vperm.xlu0 %358, %v288
      %v360 = vpop.permute.xlu0 %359
      %361 = vset.pattern.permute.xlu0 0
      %362 = vperm.xlu0 %361, %v289
      %v363 = vpop.permute.xlu0 %362
      %364 = vset.pattern.permute.xlu0 0
      %365 = vperm.xlu0 %364, %v290
      %v366 = vpop.permute.xlu0 %365
      %367 = vset.pattern.permute.xlu0 0
      %368 = vperm.xlu0 %367, %v291
      %v369 = vpop.permute.xlu0 %368
      %370 = vset.pattern.permute.xlu0 0
      %371 = vperm.xlu0 %370, %v292
      %v372 = vpop.permute.xlu0 %371
      %373 = vset.pattern.permute.xlu0 0
      %374 = vperm.xlu0 %373, %v293
      %v375 = vpop.permute.xlu0 %374
      %376 = vset.pattern.permute.xlu0 0
      %377 = vperm.xlu0 %376, %v294
      %v378 = vpop.permute.xlu0 %377
      %379 = vset.pattern.permute.xlu0 0
      %380 = vperm.xlu0 %379, %v295
      %v381 = vpop.permute.xlu0 %380
      %382 = vset.pattern.permute.xlu0 0
      %383 = vperm.xlu0 %382, %v296
      %v384 = vpop.permute.xlu0 %383
      %385 = vset.pattern.permute.xlu0 0
      %386 = vperm.xlu0 %385, %v297
      %v387 = vpop.permute.xlu0 %386
      %388 = vset.pattern.permute.xlu0 0
      %389 = vperm.xlu0 %388, %v298
      %v390 = vpop.permute.xlu0 %389
      %391 = vset.pattern.permute.xlu0 0
      %392 = vperm.xlu0 %391, %v299
      %v393 = vpop.permute.xlu0 %392
      %394 = vset.pattern.permute.xlu0 0
      %395 = vperm.xlu0 %394, %v300
      %v396 = vpop.permute.xlu0 %395
      %vm397 = vcmp.eq.s32.totalorder %v263, %v303
      %vm398 = vcmp.eq.s32.totalorder %v263, %v306
      %vm399 = vcmp.eq.s32.totalorder %v263, %v309
      %vm400 = vcmp.eq.s32.totalorder %v263, %v312
      %vm401 = vcmp.eq.s32.totalorder %v263, %v315
      %vm402 = vcmp.eq.s32.totalorder %v263, %v318
      %vm403 = vcmp.eq.s32.totalorder %v263, %v321
      %vm404 = vcmp.eq.s32.totalorder %v263, %v324
      %vm405 = vcmp.eq.s32.totalorder %v263, %v327
      %vm406 = vcmp.eq.s32.totalorder %v263, %v330
      %vm407 = vcmp.eq.s32.totalorder %v263, %v333
      %vm408 = vcmp.eq.s32.totalorder %v263, %v336
      %vm409 = vcmp.eq.s32.totalorder %v263, %v339
      %vm410 = vcmp.eq.s32.totalorder %v263, %v342
      %vm411 = vcmp.eq.s32.totalorder %v263, %v345
      %vm412 = vcmp.eq.s32.totalorder %v263, %v348
      %vm413 = vcmp.eq.s32.totalorder %v263, %v351
      %vm414 = vcmp.eq.s32.totalorder %v263, %v354
      %vm415 = vcmp.eq.s32.totalorder %v263, %v357
      %vm416 = vcmp.eq.s32.totalorder %v263, %v360
      %vm417 = vcmp.eq.s32.totalorder %v263, %v363
      %vm418 = vcmp.eq.s32.totalorder %v263, %v366
      %vm419 = vcmp.eq.s32.totalorder %v263, %v369
      %vm420 = vcmp.eq.s32.totalorder %v263, %v372
      %vm421 = vcmp.eq.s32.totalorder %v263, %v375
      %vm422 = vcmp.eq.s32.totalorder %v263, %v378
      %vm423 = vcmp.eq.s32.totalorder %v263, %v381
      %vm424 = vcmp.eq.s32.totalorder %v263, %v384
      %vm425 = vcmp.eq.s32.totalorder %v263, %v387
      %vm426 = vcmp.eq.s32.totalorder %v263, %v390
      %vm427 = vcmp.eq.s32.totalorder %v263, %v393
      %vm428 = vcmp.eq.s32.totalorder %v263, %v396
      %v429 = vsel %vm397, 1, 0
      %v430 = vsel %vm398, 1, 0
      %v431 = vsel %vm399, 1, 0
      %v432 = vsel %vm400, 1, 0
      %v433 = vsel %vm401, 1, 0
      %v434 = vsel %vm402, 1, 0
      %v435 = vsel %vm403, 1, 0
      %v436 = vsel %vm404, 1, 0
      %v437 = vsel %vm405, 1, 0
      %v438 = vsel %vm406, 1, 0
      %v439 = vsel %vm407, 1, 0
      %v440 = vsel %vm408, 1, 0
      %v441 = vsel %vm409, 1, 0
      %v442 = vsel %vm410, 1, 0
      %v443 = vsel %vm411, 1, 0
      %v444 = vsel %vm412, 1, 0
      %v445 = vsel %vm413, 1, 0
      %v446 = vsel %vm414, 1, 0
      %v447 = vsel %vm415, 1, 0
      %v448 = vsel %vm416, 1, 0
      %v449 = vsel %vm417, 1, 0
      %v450 = vsel %vm418, 1, 0
      %v451 = vsel %vm419, 1, 0
      %v452 = vsel %vm420, 1, 0
      %v453 = vsel %vm421, 1, 0
      %v454 = vsel %vm422, 1, 0
      %v455 = vsel %vm423, 1, 0
      %v456 = vsel %vm424, 1, 0
      %v457 = vsel %vm425, 1, 0
      %v458 = vsel %vm426, 1, 0
      %v459 = vsel %vm427, 1, 0
      %v460 = vsel %vm428, 1, 0
      %v461 = vcvt.s32.f32 %v429
      %v462 = vcvt.s32.f32 %v430
      %v463 = vcvt.s32.f32 %v431
      %v464 = vcvt.s32.f32 %v432
      %v465 = vcvt.s32.f32 %v433
      %v466 = vcvt.s32.f32 %v434
      %v467 = vcvt.s32.f32 %v435
      %v468 = vcvt.s32.f32 %v436
      %v469 = vcvt.s32.f32 %v437
      %v470 = vcvt.s32.f32 %v438
      %v471 = vcvt.s32.f32 %v439
      %v472 = vcvt.s32.f32 %v440
      %v473 = vcvt.s32.f32 %v441
      %v474 = vcvt.s32.f32 %v442
      %v475 = vcvt.s32.f32 %v443
      %v476 = vcvt.s32.f32 %v444
      %v477 = vcvt.s32.f32 %v445
      %v478 = vcvt.s32.f32 %v446
      %v479 = vcvt.s32.f32 %v447
      %v480 = vcvt.s32.f32 %v448
      %v481 = vcvt.s32.f32 %v449
      %v482 = vcvt.s32.f32 %v450
      %v483 = vcvt.s32.f32 %v451
      %v484 = vcvt.s32.f32 %v452
      %v485 = vcvt.s32.f32 %v453
      %v486 = vcvt.s32.f32 %v454
      %v487 = vcvt.s32.f32 %v455
      %v488 = vcvt.s32.f32 %v456
      %v489 = vcvt.s32.f32 %v457
      %v490 = vcvt.s32.f32 %v458
      %v491 = vcvt.s32.f32 %v459
      %v492 = vcvt.s32.f32 %v460
      %v493 = vld [vmem:[%s254] sm:$0x1]
      %v495 = vlaneseq
      %v496 = vshrl.u32 %v495, 7
      %v497 = vsub.s32 0, %v496
      %v498 = vrot.slane %v258, %v497
      %v499 = vlaneseq
      %v500 = vshrl.u32 %v499, 7
      %v501 = vsub.s32 1, %v500
      %v502 = vrot.slane %v258, %v501
      %505 = vmatprep.subr.mxu0 0.0
      %506 = vmatpush1.msra.mxu0 %v461
      %507 = vmatprep.subr.mxu0 0.0
      %508 = vmatpush1.msra.mxu0 %v462
      %509 = vmatprep.subr.mxu0 0.0
      %510 = vmatpush1.msra.mxu0 %v463
      %511 = vmatprep.subr.mxu0 0.0
      %512 = vmatpush1.msra.mxu0 %v464
      %513 = vmatprep.subr.mxu0 0.0
      %514 = vmatpush1.msra.mxu0 %v465
      %515 = vmatprep.subr.mxu0 0.0
      %516 = vmatpush1.msra.mxu0 %v466
      %517 = vmatprep.subr.mxu0 0.0
      %518 = vmatpush1.msra.mxu0 %v467
      %519 = vmatprep.subr.mxu0 0.0
      %520 = vmatpush1.msra.mxu0 %v468
      %521 = vmatprep.subr.mxu0 0.0
      %522 = vmatpush1.msra.mxu0 %v469
      %523 = vmatprep.subr.mxu0 0.0
      %524 = vmatpush1.msra.mxu0 %v470
      %525 = vmatprep.subr.mxu0 0.0
      %526 = vmatpush1.msra.mxu0 %v471
      %527 = vmatprep.subr.mxu0 0.0
      %528 = vmatpush1.msra.mxu0 %v472
      %529 = vmatprep.subr.mxu0 0.0
      %530 = vmatpush1.msra.mxu0 %v473
      %531 = vmatprep.subr.mxu0 0.0
      %532 = vmatpush1.msra.mxu0 %v474
      %533 = vmatprep.subr.mxu0 0.0
      %534 = vmatpush1.msra.mxu0 %v475
      %535 = vmatprep.subr.mxu0 0.0
      %536 = vmatpush1.msra.mxu0 %v476
      %537 = vmatprep.subr.mxu0 0.0
      %538 = vmatpush1.msra.mxu0 %v477
      %539 = vmatprep.subr.mxu0 0.0
      %540 = vmatpush1.msra.mxu0 %v478
      %541 = vmatprep.subr.mxu0 0.0
      %542 = vmatpush1.msra.mxu0 %v479
      %543 = vmatprep.subr.mxu0 0.0
      %544 = vmatpush1.msra.mxu0 %v480
      %545 = vmatprep.subr.mxu0 0.0
      %546 = vmatpush1.msra.mxu0 %v481
      %547 = vmatprep.subr.mxu0 0.0
      %548 = vmatpush1.msra.mxu0 %v482
      %549 = vmatprep.subr.mxu0 0.0
      %550 = vmatpush1.msra.mxu0 %v483
      %551 = vmatprep.subr.mxu0 0.0
      %552 = vmatpush1.msra.mxu0 %v484
      %553 = vmatprep.subr.mxu0 0.0
      %554 = vmatpush1.msra.mxu0 %v485
      %555 = vmatprep.subr.mxu0 0.0
      %556 = vmatpush1.msra.mxu0 %v486
      %557 = vmatprep.subr.mxu0 0.0
      %558 = vmatpush1.msra.mxu0 %v487
      %559 = vmatprep.subr.mxu0 0.0
      %560 = vmatpush1.msra.mxu0 %v488
      %561 = vmatprep.subr.mxu0 0.0
      %562 = vmatpush1.msra.mxu0 %v489
      %563 = vmatprep.subr.mxu0 0.0
      %564 = vmatpush1.msra.mxu0 %v490
      %565 = vmatprep.subr.mxu0 0.0
      %566 = vmatpush1.msra.mxu0 %v491
      %567 = vmatprep.subr.mxu0 0.0
      %568 = vmatpush1.msra.mxu0 %v492
      %569 = vmatprep.mubr.f32.mxu0 %v502
      %570 = vmatmul.mubr.f32.gmra.mrb[0].mxu0 %v498
      %v571 = vpop.f32.mrb[0].mxu0
      %v572 = vadd.f32 0.0, %v571
      %v573 = vpop.f32.mrb[0].mxu0
      %574 = vdwg.mxu0
      %v575 = vadd.f32 %v493, %v572
      %576 = vst [vmem:[%s254] sm:$0x1] %v575
      %p577 = scmp.eq.s32.totalorder %s21, 2
      // Predicated region
      $region37: #{udf_edge_weight_norm.2} parent=31 // pred_check
        %p578 = pneg %p577
      $region38: #{udf_edge_weight_norm.2} parent=31 // pred_check_branch
        %580 = sbr.rel (%p578) target = $region40
      $region39: #{udf_edge_weight_norm.2} parent=31 // pred_region
        %v581 = vld [vmem:[%s254] sm:$0x1]
        %v582 = vadd.f32 %v581, 0.0
        %vm583 = vcmp.gt.f32.partialorder %v582, 0.0
        %v584 = vrsqrt.pop %v582
        %v585 = vsel %vm583, %v584, 0.0
        %586 = vst [vmem:[%s254] sm:$0x1] %v585
      $region40: #{udf_edge_weight_norm.2} parent=31 // pred_fallthru
        _
      // Predicated region
      $region41: #{udf_edge_weight_norm.2} parent=31 // pred_check
        %p587 = pneg %p264
      $region42: #{udf_edge_weight_norm.2} parent=31 // pred_check_branch
        %589 = sbr.rel (%p587) target = $region44
      $region43: #{udf_edge_weight_norm.2} parent=31 // pred_region
        %590 = vst [vmem:[%s257] sm:$0x1] 0.0
      $region44: #{udf_edge_weight_norm.2} parent=31 // pred_fallthru
        _
      %v591 = vld [vmem:[%s245] sm:$0xff]
      %v592 = vld [vmem:[%s245 + $0x8] sm:$0xff]
      %v593 = vld [vmem:[%s245 + $0x10] sm:$0xff]
      %v594 = vld [vmem:[%s245 + $0x18] sm:$0xff]
      %v595 = vld [vmem:[%s245 + $0x20] sm:$0xff]
      %v596 = vld [vmem:[%s245 + $0x28] sm:$0xff]
      %v597 = vld [vmem:[%s245 + $0x30] sm:$0xff]
      %v598 = vld [vmem:[%s245 + $0x38] sm:$0xff]
      %v599 = vld [vmem:[%s245 + $0x40] sm:$0xff]
      %v600 = vld [vmem:[%s245 + $0x48] sm:$0xff]
      %v601 = vld [vmem:[%s245 + $0x50] sm:$0xff]
      %v602 = vld [vmem:[%s245 + $0x58] sm:$0xff]
      %v603 = vld [vmem:[%s245 + $0x60] sm:$0xff]
      %v604 = vld [vmem:[%s245 + $0x68] sm:$0xff]
      %v605 = vld [vmem:[%s245 + $0x70] sm:$0xff]
      %v606 = vld [vmem:[%s245 + $0x78] sm:$0xff]
      %v607 = vld [vmem:[%s245 + $0x80] sm:$0xff]
      %v608 = vld [vmem:[%s245 + $0x88] sm:$0xff]
      %v609 = vld [vmem:[%s245 + $0x90] sm:$0xff]
      %v610 = vld [vmem:[%s245 + $0x98] sm:$0xff]
      %v611 = vld [vmem:[%s245 + $0xa0] sm:$0xff]
      %v612 = vld [vmem:[%s245 + $0xa8] sm:$0xff]
      %v613 = vld [vmem:[%s245 + $0xb0] sm:$0xff]
      %v614 = vld [vmem:[%s245 + $0xb8] sm:$0xff]
      %v615 = vld [vmem:[%s245 + $0xc0] sm:$0xff]
      %v616 = vld [vmem:[%s245 + $0xc8] sm:$0xff]
      %v617 = vld [vmem:[%s245 + $0xd0] sm:$0xff]
      %v618 = vld [vmem:[%s245 + $0xd8] sm:$0xff]
      %v619 = vld [vmem:[%s245 + $0xe0] sm:$0xff]
      %v620 = vld [vmem:[%s245 + $0xe8] sm:$0xff]
      %v621 = vld [vmem:[%s245 + $0xf0] sm:$0xff]
      %v622 = vld [vmem:[%s245 + $0xf8] sm:$0xff]
      %623 = vset.pattern.permute.xlu0 0
      %624 = vperm.xlu0 %623, %v591
      %v625 = vpop.permute.xlu0 %624
      %626 = vset.pattern.permute.xlu0 0
      %627 = vperm.xlu0 %626, %v592
      %v628 = vpop.permute.xlu0 %627
      %629 = vset.pattern.permute.xlu0 0
      %630 = vperm.xlu0 %629, %v593
      %v631 = vpop.permute.xlu0 %630
      %632 = vset.pattern.permute.xlu0 0
      %633 = vperm.xlu0 %632, %v594
      %v634 = vpop.permute.xlu0 %633
      %635 = vset.pattern.permute.xlu0 0
      %636 = vperm.xlu0 %635, %v595
      %v637 = vpop.permute.xlu0 %636
      %638 = vset.pattern.permute.xlu0 0
      %639 = vperm.xlu0 %638, %v596
      %v640 = vpop.permute.xlu0 %639
      %641 = vset.pattern.permute.xlu0 0
      %642 = vperm.xlu0 %641, %v597
      %v643 = vpop.permute.xlu0 %642
      %644 = vset.pattern.permute.xlu0 0
      %645 = vperm.xlu0 %644, %v598
      %v646 = vpop.permute.xlu0 %645
      %647 = vset.pattern.permute.xlu0 0
      %648 = vperm.xlu0 %647, %v599
      %v649 = vpop.permute.xlu0 %648
      %650 = vset.pattern.permute.xlu0 0
      %651 = vperm.xlu0 %650, %v600
      %v652 = vpop.permute.xlu0 %651
      %653 = vset.pattern.permute.xlu0 0
      %654 = vperm.xlu0 %653, %v601
      %v655 = vpop.permute.xlu0 %654
      %656 = vset.pattern.permute.xlu0 0
      %657 = vperm.xlu0 %656, %v602
      %v658 = vpop.permute.xlu0 %657
      %659 = vset.pattern.permute.xlu0 0
      %660 = vperm.xlu0 %659, %v603
      %v661 = vpop.permute.xlu0 %660
      %662 = vset.pattern.permute.xlu0 0
      %663 = vperm.xlu0 %662, %v604
      %v664 = vpop.permute.xlu0 %663
      %665 = vset.pattern.permute.xlu0 0
      %666 = vperm.xlu0 %665, %v605
      %v667 = vpop.permute.xlu0 %666
      %668 = vset.pattern.permute.xlu0 0
      %669 = vperm.xlu0 %668, %v606
      %v670 = vpop.permute.xlu0 %669
      %671 = vset.pattern.permute.xlu0 0
      %672 = vperm.xlu0 %671, %v607
      %v673 = vpop.permute.xlu0 %672
      %674 = vset.pattern.permute.xlu0 0
      %675 = vperm.xlu0 %674, %v608
      %v676 = vpop.permute.xlu0 %675
      %677 = vset.pattern.permute.xlu0 0
      %678 = vperm.xlu0 %677, %v609
      %v679 = vpop.permute.xlu0 %678
      %680 = vset.pattern.permute.xlu0 0
      %681 = vperm.xlu0 %680, %v610
      %v682 = vpop.permute.xlu0 %681
      %683 = vset.pattern.permute.xlu0 0
      %684 = vperm.xlu0 %683, %v611
      %v685 = vpop.permute.xlu0 %684
      %686 = vset.pattern.permute.xlu0 0
      %687 = vperm.xlu0 %686, %v612
      %v688 = vpop.permute.xlu0 %687
      %689 = vset.pattern.permute.xlu0 0
      %690 = vperm.xlu0 %689, %v613
      %v691 = vpop.permute.xlu0 %690
      %692 = vset.pattern.permute.xlu0 0
      %693 = vperm.xlu0 %692, %v614
      %v694 = vpop.permute.xlu0 %693
      %695 = vset.pattern.permute.xlu0 0
      %696 = vperm.xlu0 %695, %v615
      %v697 = vpop.permute.xlu0 %696
      %698 = vset.pattern.permute.xlu0 0
      %699 = vperm.xlu0 %698, %v616
      %v700 = vpop.permute.xlu0 %699
      %701 = vset.pattern.permute.xlu0 0
      %702 = vperm.xlu0 %701, %v617
      %v703 = vpop.permute.xlu0 %702
      %704 = vset.pattern.permute.xlu0 0
      %705 = vperm.xlu0 %704, %v618
      %v706 = vpop.permute.xlu0 %705
      %707 = vset.pattern.permute.xlu0 0
      %708 = vperm.xlu0 %707, %v619
      %v709 = vpop.permute.xlu0 %708
      %710 = vset.pattern.permute.xlu0 0
      %711 = vperm.xlu0 %710, %v620
      %v712 = vpop.permute.xlu0 %711
      %713 = vset.pattern.permute.xlu0 0
      %714 = vperm.xlu0 %713, %v621
      %v715 = vpop.permute.xlu0 %714
      %716 = vset.pattern.permute.xlu0 0
      %717 = vperm.xlu0 %716, %v622
      %v718 = vpop.permute.xlu0 %717
      %vm719 = vcmp.eq.s32.totalorder %v263, %v625
      %vm720 = vcmp.eq.s32.totalorder %v263, %v628
      %vm721 = vcmp.eq.s32.totalorder %v263, %v631
      %vm722 = vcmp.eq.s32.totalorder %v263, %v634
      %vm723 = vcmp.eq.s32.totalorder %v263, %v637
      %vm724 = vcmp.eq.s32.totalorder %v263, %v640
      %vm725 = vcmp.eq.s32.totalorder %v263, %v643
      %vm726 = vcmp.eq.s32.totalorder %v263, %v646
      %vm727 = vcmp.eq.s32.totalorder %v263, %v649
      %vm728 = vcmp.eq.s32.totalorder %v263, %v652
      %vm729 = vcmp.eq.s32.totalorder %v263, %v655
      %vm730 = vcmp.eq.s32.totalorder %v263, %v658
      %vm731 = vcmp.eq.s32.totalorder %v263, %v661
      %vm732 = vcmp.eq.s32.totalorder %v263, %v664
      %vm733 = vcmp.eq.s32.totalorder %v263, %v667
      %vm734 = vcmp.eq.s32.totalorder %v263, %v670
      %vm735 = vcmp.eq.s32.totalorder %v263, %v673
      %vm736 = vcmp.eq.s32.totalorder %v263, %v676
      %vm737 = vcmp.eq.s32.totalorder %v263, %v679
      %vm738 = vcmp.eq.s32.totalorder %v263, %v682
      %vm739 = vcmp.eq.s32.totalorder %v263, %v685
      %vm740 = vcmp.eq.s32.totalorder %v263, %v688
      %vm741 = vcmp.eq.s32.totalorder %v263, %v691
      %vm742 = vcmp.eq.s32.totalorder %v263, %v694
      %vm743 = vcmp.eq.s32.totalorder %v263, %v697
      %vm744 = vcmp.eq.s32.totalorder %v263, %v700
      %vm745 = vcmp.eq.s32.totalorder %v263, %v703
      %vm746 = vcmp.eq.s32.totalorder %v263, %v706
      %vm747 = vcmp.eq.s32.totalorder %v263, %v709
      %vm748 = vcmp.eq.s32.totalorder %v263, %v712
      %vm749 = vcmp.eq.s32.totalorder %v263, %v715
      %vm750 = vcmp.eq.s32.totalorder %v263, %v718
      %v751 = vsel %vm719, 1, 0
      %v752 = vsel %vm720, 1, 0
      %v753 = vsel %vm721, 1, 0
      %v754 = vsel %vm722, 1, 0
      %v755 = vsel %vm723, 1, 0
      %v756 = vsel %vm724, 1, 0
      %v757 = vsel %vm725, 1, 0
      %v758 = vsel %vm726, 1, 0
      %v759 = vsel %vm727, 1, 0
      %v760 = vsel %vm728, 1, 0
      %v761 = vsel %vm729, 1, 0
      %v762 = vsel %vm730, 1, 0
      %v763 = vsel %vm731, 1, 0
      %v764 = vsel %vm732, 1, 0
      %v765 = vsel %vm733, 1, 0
      %v766 = vsel %vm734, 1, 0
      %v767 = vsel %vm735, 1, 0
      %v768 = vsel %vm736, 1, 0
      %v769 = vsel %vm737, 1, 0
      %v770 = vsel %vm738, 1, 0
      %v771 = vsel %vm739, 1, 0
      %v772 = vsel %vm740, 1, 0
      %v773 = vsel %vm741, 1, 0
      %v774 = vsel %vm742, 1, 0
      %v775 = vsel %vm743, 1, 0
      %v776 = vsel %vm744, 1, 0
      %v777 = vsel %vm745, 1, 0
      %v778 = vsel %vm746, 1, 0
      %v779 = vsel %vm747, 1, 0
      %v780 = vsel %vm748, 1, 0
      %v781 = vsel %vm749, 1, 0
      %v782 = vsel %vm750, 1, 0
      %v783 = vcvt.s32.f32 %v751
      %v784 = vcvt.s32.f32 %v752
      %v785 = vcvt.s32.f32 %v753
      %v786 = vcvt.s32.f32 %v754
      %v787 = vcvt.s32.f32 %v755
      %v788 = vcvt.s32.f32 %v756
      %v789 = vcvt.s32.f32 %v757
      %v790 = vcvt.s32.f32 %v758
      %v791 = vcvt.s32.f32 %v759
      %v792 = vcvt.s32.f32 %v760
      %v793 = vcvt.s32.f32 %v761
      %v794 = vcvt.s32.f32 %v762
      %v795 = vcvt.s32.f32 %v763
      %v796 = vcvt.s32.f32 %v764
      %v797 = vcvt.s32.f32 %v765
      %v798 = vcvt.s32.f32 %v766
      %v799 = vcvt.s32.f32 %v767
      %v800 = vcvt.s32.f32 %v768
      %v801 = vcvt.s32.f32 %v769
      %v802 = vcvt.s32.f32 %v770
      %v803 = vcvt.s32.f32 %v771
      %v804 = vcvt.s32.f32 %v772
      %v805 = vcvt.s32.f32 %v773
      %v806 = vcvt.s32.f32 %v774
      %v807 = vcvt.s32.f32 %v775
      %v808 = vcvt.s32.f32 %v776
      %v809 = vcvt.s32.f32 %v777
      %v810 = vcvt.s32.f32 %v778
      %v811 = vcvt.s32.f32 %v779
      %v812 = vcvt.s32.f32 %v780
      %v813 = vcvt.s32.f32 %v781
      %v814 = vcvt.s32.f32 %v782
      %v815 = vld [vmem:[%s257] sm:$0x1]
      %816 = vmatprep.subr.mxu0 0.0
      %817 = vmatpush1.msra.mxu0 %v783
      %818 = vmatprep.subr.mxu0 0.0
      %819 = vmatpush1.msra.mxu0 %v784
      %820 = vmatprep.subr.mxu0 0.0
      %821 = vmatpush1.msra.mxu0 %v785
      %822 = vmatprep.subr.mxu0 0.0
      %823 = vmatpush1.msra.mxu0 %v786
      %824 = vmatprep.subr.mxu0 0.0
      %825 = vmatpush1.msra.mxu0 %v787
      %826 = vmatprep.subr.mxu0 0.0
      %827 = vmatpush1.msra.mxu0 %v788
      %828 = vmatprep.subr.mxu0 0.0
      %829 = vmatpush1.msra.mxu0 %v789
      %830 = vmatprep.subr.mxu0 0.0
      %831 = vmatpush1.msra.mxu0 %v790
      %832 = vmatprep.subr.mxu0 0.0
      %833 = vmatpush1.msra.mxu0 %v791
      %834 = vmatprep.subr.mxu0 0.0
      %835 = vmatpush1.msra.mxu0 %v792
      %836 = vmatprep.subr.mxu0 0.0
      %837 = vmatpush1.msra.mxu0 %v793
      %838 = vmatprep.subr.mxu0 0.0
      %839 = vmatpush1.msra.mxu0 %v794
      %840 = vmatprep.subr.mxu0 0.0
      %841 = vmatpush1.msra.mxu0 %v795
      %842 = vmatprep.subr.mxu0 0.0
      %843 = vmatpush1.msra.mxu0 %v796
      %844 = vmatprep.subr.mxu0 0.0
      %845 = vmatpush1.msra.mxu0 %v797
      %846 = vmatprep.subr.mxu0 0.0
      %847 = vmatpush1.msra.mxu0 %v798
      %848 = vmatprep.subr.mxu0 0.0
      %849 = vmatpush1.msra.mxu0 %v799
      %850 = vmatprep.subr.mxu0 0.0
      %851 = vmatpush1.msra.mxu0 %v800
      %852 = vmatprep.subr.mxu0 0.0
      %853 = vmatpush1.msra.mxu0 %v801
      %854 = vmatprep.subr.mxu0 0.0
      %855 = vmatpush1.msra.mxu0 %v802
      %856 = vmatprep.subr.mxu0 0.0
      %857 = vmatpush1.msra.mxu0 %v803
      %858 = vmatprep.subr.mxu0 0.0
      %859 = vmatpush1.msra.mxu0 %v804
      %860 = vmatprep.subr.mxu0 0.0
      %861 = vmatpush1.msra.mxu0 %v805
      %862 = vmatprep.subr.mxu0 0.0
      %863 = vmatpush1.msra.mxu0 %v806
      %864 = vmatprep.subr.mxu0 0.0
      %865 = vmatpush1.msra.mxu0 %v807
      %866 = vmatprep.subr.mxu0 0.0
      %867 = vmatpush1.msra.mxu0 %v808
      %868 = vmatprep.subr.mxu0 0.0
      %869 = vmatpush1.msra.mxu0 %v809
      %870 = vmatprep.subr.mxu0 0.0
      %871 = vmatpush1.msra.mxu0 %v810
      %872 = vmatprep.subr.mxu0 0.0
      %873 = vmatpush1.msra.mxu0 %v811
      %874 = vmatprep.subr.mxu0 0.0
      %875 = vmatpush1.msra.mxu0 %v812
      %876 = vmatprep.subr.mxu0 0.0
      %877 = vmatpush1.msra.mxu0 %v813
      %878 = vmatprep.subr.mxu0 0.0
      %879 = vmatpush1.msra.mxu0 %v814
      %880 = vmatprep.mubr.f32.mxu0 %v502
      %881 = vmatmul.mubr.f32.gmra.mrb[0].mxu0 %v498
      %v882 = vpop.f32.mrb[0].mxu0
      %v883 = vadd.f32 0.0, %v882
      %v884 = vpop.f32.mrb[0].mxu0
      %885 = vdwg.mxu0
      %v886 = vadd.f32 %v815, %v883
      %887 = vst [vmem:[%s257] sm:$0x1] %v886
      // Predicated region
      $region45: #{udf_edge_weight_norm.2} parent=31 // pred_check
        %p888 = pneg %p577
      $region46: #{udf_edge_weight_norm.2} parent=31 // pred_check_branch
        %890 = sbr.rel (%p888) target = $region48
      $region47: #{udf_edge_weight_norm.2} parent=31 // pred_region
        %v891 = vld [vmem:[%s257] sm:$0x1]
        %v892 = vadd.f32 %v891, 0.0
        %vm893 = vcmp.gt.f32.partialorder %v892, 0.0
        %v894 = vrsqrt.pop %v892
        %v895 = vsel %vm893, %v894, 0.0
        %896 = vst [vmem:[%s257] sm:$0x1] %v895
      $region48: #{udf_edge_weight_norm.2} parent=31 // pred_fallthru
        _
      %p897 = scmp.lt.s32.totalorder %s20, 1
      %s898 = scalar_select %p897, %s20, 1
      %s899 = scalar_lea.vmem %s3, %s898
      %p900 = scmp.lt.s32.totalorder %s20, 1
      %s901 = scalar_select %p900, %s20, 1
      %s902 = scalar_lea.vmem %s4, %s901
      // Predicated region
      $region49: #{udf_edge_weight_norm.2} parent=31 // pred_check
        %p903 = pneg %p124
      $region50: #{udf_edge_weight_norm.2} parent=31 // pred_check_branch
        %905 = sbr.rel (%p903) target = $region52
      $region51: #{udf_edge_weight_norm.2} parent=31 // pred_region
        _
      $region52: #{udf_edge_weight_norm.2} parent=31 // pred_fallthru
        _
      // Predicated region
      $region53: #{udf_edge_weight_norm.2} parent=31 // pred_check
        %p906 = pneg %p150
      $region54: #{udf_edge_weight_norm.2} parent=31 // pred_check_branch
        %908 = sbr.rel (%p906) target = $region56
      $region55: #{udf_edge_weight_norm.2} parent=31 // pred_region
        _
      $region56: #{udf_edge_weight_norm.2} parent=31 // pred_fallthru
        _
    $region32: #{udf_edge_weight_norm.2} parent=5 // pred_fallthru
      _
    %p909 = scmp.le.s32.totalorder 2, %s11
    // Predicated region
    $region57: #{udf_edge_weight_norm.2} parent=5 // pred_check
      %p910 = pneg %p909
    $region58: #{udf_edge_weight_norm.2} parent=5 // pred_check_branch
      %912 = sbr.rel (%p910) target = $region60
    $region59: #{udf_edge_weight_norm.2} parent=5 // pred_region
      %s913 = ssub.s32 %s11, 2
      // Predicated region
      $region61: #{udf_edge_weight_norm.2} parent=59 // pred_check
        %p914 = pneg %p130
      $region62: #{udf_edge_weight_norm.2} parent=59 // pred_check_branch
        %916 = sbr.rel (%p914) target = $region64
      $region63: #{udf_edge_weight_norm.2} parent=59 // pred_region
        %p917 = scmp.lt.s32.totalorder %s22, 1
        %s918 = scalar_select %p917, %s22, 1
        %s919 = scalar_lea.vmem %s3, %s918
      $region64: #{udf_edge_weight_norm.2} parent=59 // pred_fallthru
        _
      // Predicated region
      $region65: #{udf_edge_weight_norm.2} parent=59 // pred_check
        %p920 = pneg %p156
      $region66: #{udf_edge_weight_norm.2} parent=59 // pred_check_branch
        %922 = sbr.rel (%p920) target = $region68
      $region67: #{udf_edge_weight_norm.2} parent=59 // pred_region
        %p923 = scmp.lt.s32.totalorder %s22, 1
        %s924 = scalar_select %p923, %s22, 1
        %s925 = scalar_lea.vmem %s4, %s924
      $region68: #{udf_edge_weight_norm.2} parent=59 // pred_fallthru
        _
    $region60: #{udf_edge_weight_norm.2} parent=5 // pred_fallthru
      _
  $region6: #{udf_edge_weight_norm.2} parent=0 // loop_footer
    %s15 = sadd.s32 1, %s11
  $region7: #{udf_edge_weight_norm.2} parent=0 // loop_footer_branch
    %10 = sbr.rel target = $region3
  $region8: #{udf_edge_weight_norm.2} parent=0 // loop_exit
    _

</llo_original>
